<compile_context>
chip_gen: v7x
topology: tpu7x:2x2x1
jax: 0.10.0
libtpu: 0.0.40
codegen_flags: <defaults>
</compile_context>

<pallas_src>
import jax
import jax.numpy as jnp
from jax.experimental import pallas as pl
from jax.experimental.pallas import tpu as pltpu

# ----------------------------- problem sizes --------------------------------
N = 2          # batch
IN_C = 4       # in_c
GROUPS = 8     # groups (hidden / depthwise channels)
OUT_C = 8      # out_c
H = W = 16     # input spatial
KH = KW = 3    # depthwise kernel
STRIDE = 2
PAD = 1
HO = (H + 2 * PAD - KH) // STRIDE + 1   # 8
WO = (W + 2 * PAD - KW) // STRIDE + 1   # 8
HW = H * W                              # 256
HWO = HO * WO                           # 64
PADF = 32                               # flat zero extension, must be >= W + 1
EPS = 1e-5

assert PADF >= W + 1, "zero extension must cover the +-(W+1) tap shifts"
assert (W & (W - 1)) == 0 and (WO & (WO - 1)) == 0, "bit tricks assume pow2 sizes"
LOG2_WO = WO.bit_length() - 1

# packed parameter block: columns of a (N*GROUPS, P_COLS) f32 array
PCOL_W1 = 0                             # (N*G, N*IN_C+1) block-diag w1 (+b1 col)
PCOL_WD = PCOL_W1 + (N * IN_C + 1)      # (N*G, 9) depthwise weights * s2
PCOL_B2 = PCOL_WD + KH * KW             # (N*G, 1)
PCOL_A1 = PCOL_B2 + 1                   # (N*G, 1) PReLU1 alpha
PCOL_A2 = PCOL_A1 + 1                   # (N*G, 1) PReLU2 alpha
PCOL_W3 = PCOL_A2 + 1                   # rows 0:OUT_C -> (OUT_C, GROUPS) w3 * s3
PCOL_B3 = PCOL_W3 + GROUPS              # rows 0:OUT_C -> (OUT_C, 1)
P_COLS = 32
assert PCOL_B3 + 1 <= P_COLS


def _fold_bn(gamma, beta, mean, var):
    """Inference-mode BatchNorm folded to y = x * scale + bias."""
    scale = gamma / jnp.sqrt(var + EPS)
    bias = beta - mean * scale
    return scale, bias


# ------------------------------ Pallas kernel -------------------------------
def _depthwise_kernel(x_ref, p_ref, o_ref, yext_ref):
    f32 = jnp.float32
    p = p_ref[...]                                         # (N*G, 32)

    w1_aug = p[:, PCOL_W1:PCOL_WD]                         # (N*G, N*IN_C+1)
    wd2 = p[:, PCOL_WD:PCOL_B2]                            # (N*G, 9)  (* s2 folded)
    b2 = p[:, PCOL_B2:PCOL_B2 + 1]                         # (N*G, 1)
    a1 = p[:, PCOL_A1:PCOL_A1 + 1]                         # (N*G, 1)
    a2 = p[:, PCOL_A2:PCOL_A2 + 1]                         # (N*G, 1)
    w3s = p[0:OUT_C, PCOL_W3:PCOL_W3 + GROUPS]             # (OUT_C, G) (* s3 folded)
    b3 = p[0:OUT_C, PCOL_B3:PCOL_B3 + 1]                   # (OUT_C, 1)

    # ---- stage 1: fused-batch 1x1 conv + BN + PReLU, one MXU call ----------
    # x is (N*IN_C + 1, HW): batch stacked on sublanes + a ones row that
    # carries the folded BN1 bias through the block-diagonal weight.
    y = jnp.dot(w1_aug, x_ref[...], preferred_element_type=f32)   # (N*G, HW)
    y = jnp.where(y > 0, y, a1 * y)                               # PReLU1

    # ---- stage 2: depthwise 3x3, stride 2, pad 1 ---------------------------
    # Zero-extended flat plane in VMEM scratch; each (image, channel) is its
    # own sublane row so tap shifts never bleed across images.
    yext_ref[...] = jnp.zeros((N * GROUPS, PADF + HW + PADF), f32)
    yext_ref[:, PADF:PADF + HW] = y

    # Stride-2 selection matrices built in-kernel (no 64 KiB HBM DMA).
    # sel picks flat input 2i*W + 2j for output lane q = i*WO + j; sel_l is the
    # same but with output columns j == 0 zeroed (left zero padding for kw==0
    # taps).  kw==2 / kh out-of-range taps need no mask: rows fall into the
    # zero extension and column w+1 <= W-1 is always valid after subsampling.
    row = jax.lax.broadcasted_iota(jnp.int32, (HW, HWO), 0)
    col = jax.lax.broadcasted_iota(jnp.int32, (HW, HWO), 1)
    j_out = jnp.bitwise_and(col, WO - 1)
    src = (col >> LOG2_WO) * (STRIDE * W) + STRIDE * j_out
    sel = (row == src).astype(f32)                          # (HW, HWO)
    sel_l = jnp.where(j_out != 0, sel, 0.0)                 # (HW, HWO)

    # Subsample each tap on the MXU first, then do the per-channel weighting
    # at (N*G, HWO) instead of (N*G, HW): ~4x less VALU work, no per-tap masks.
    acc = jnp.zeros((N * GROUPS, HWO), f32)
    for kh in range(KH):
        for kw in range(KW):
            d = (kh - 1) * W + (kw - 1)
            t = yext_ref[:, PADF + d:PADF + d + HW]         # static ref slice
            s = jnp.dot(t, sel_l if kw == 0 else sel,
                        preferred_element_type=f32)         # (N*G, HWO)
            k = kh * KW + kw
            acc = acc + s * wd2[:, k:k + 1]
    z = acc + b2
    z = jnp.where(z > 0, z, a2 * z)                         # PReLU2, (N*G, HWO)

    # ---- stage 3: 1x1 conv + BN; single lane-dense (OUT_C, N*HWO) store ----
    o0 = jnp.dot(w3s, z[0:GROUPS], preferred_element_type=f32) + b3
    o1 = jnp.dot(w3s, z[GROUPS:], preferred_element_type=f32) + b3
    o_ref[...] = jnp.concatenate([o0, o1], axis=1)          # (OUT_C, N*HWO)


# ------------------------------ wrapper --------------------------------------
@jax.jit
def depthwise_forward(x_nchw, params):
    (w1, s1, b1, a1, wd, s2, b2, a2, w3, s3, b3) = params
    f32 = jnp.float32

    # ---- fold BN scales into the conv weights (inference-time folding) ------
    w1t = (jnp.transpose(w1) * s1[:, None]).astype(f32)                   # (G, IN_C)
    wdf = (jnp.transpose(wd.reshape(KH * KW, GROUPS)) * s2[:, None]).astype(f32)  # (G, 9)
    w3t = (jnp.transpose(w3) * s3[:, None]).astype(f32)                   # (OUT_C, G)

    # block-diagonal stage-1 weight over the sublane-stacked batch, with the
    # folded BN1 bias attached to a ones row appended to x.
    w1_aug = jnp.zeros((N * GROUPS, N * IN_C + 1), f32)
    w1_aug = w1_aug.at[0:GROUPS, 0:IN_C].set(w1t)
    w1_aug = w1_aug.at[GROUPS:, IN_C:2 * IN_C].set(w1t)
    w1_aug = w1_aug.at[:, N * IN_C].set(jnp.tile(b1.astype(f32), N))

    tile2 = lambda v: jnp.tile(v.astype(f32), N)

    # ---- single packed parameter block: one tiny (16, 32) DMA ---------------
    P = jnp.zeros((N * GROUPS, P_COLS), f32)
    P = P.at[:, PCOL_W1:PCOL_WD].set(w1_aug)
    P = P.at[:, PCOL_WD:PCOL_B2].set(jnp.tile(wdf, (N, 1)))
    P = P.at[:, PCOL_B2].set(tile2(b2))
    P = P.at[:, PCOL_A1].set(tile2(a1))
    P = P.at[:, PCOL_A2].set(tile2(a2))
    P = P.at[0:OUT_C, PCOL_W3:PCOL_W3 + GROUPS].set(w3t)
    P = P.at[0:OUT_C, PCOL_B3].set(b3.astype(f32))

    # NCHW -> (N*IN_C, H*W) is a pure reshape; append the ones row for BN1 bias.
    x_flat = x_nchw.reshape(N * IN_C, HW).astype(f32)
    x_aug = jnp.concatenate([x_flat, jnp.ones((1, HW), f32)], axis=0)     # (9, 256)

    out = pl.pallas_call(
        _depthwise_kernel,
        out_shape=jax.ShapeDtypeStruct((OUT_C, N * HWO), f32),
        grid=(1,),                                   # whole batch in ONE step
        in_specs=[
            pl.BlockSpec((N * IN_C + 1, HW), lambda i: (0, 0)),      # x (+ones)
            pl.BlockSpec((N * GROUPS, P_COLS), lambda i: (0, 0)),    # packed params
        ],
        out_specs=pl.BlockSpec((OUT_C, N * HWO), lambda i: (0, 0)),  # (8,128) lane-dense
        scratch_shapes=[pltpu.VMEM((N * GROUPS, PADF + HW + PADF), f32)],
        compiler_params=pltpu.CompilerParams(dimension_semantics=("arbitrary",)),
    )(x_aug, P)

    # (OUT_C, N*HO*WO) -> NCHW; tiny (4 KB) transpose done by XLA in the wrapper.
    return out.reshape(OUT_C, N, HO, WO).transpose(1, 0, 2, 3)


# --------------------------- pure-JAX reference ------------------------------
def ref_forward(x_nchw, params):
    (w1, s1, b1, a1, wd, s2, b2, a2, w3, s3, b3) = params
    x = jnp.transpose(x_nchw, (0, 2, 3, 1)).astype(jnp.float32)
    y = jnp.einsum('nhwc,cg->nhwg', x, w1)
    y = y * s1 + b1
    y = jnp.where(y > 0, y, a1 * y)
    yp = jnp.pad(y, ((0, 0), (PAD, PAD), (PAD, PAD), (0, 0)))
    z = jnp.zeros((N, HO, WO, GROUPS), jnp.float32)
    for kh in range(KH):
        for kw in range(KW):
            z = z + yp[:, kh:kh + STRIDE * HO:STRIDE,
                       kw:kw + STRIDE * WO:STRIDE, :] * wd[kh, kw, :]
    z = z * s2 + b2
    z = jnp.where(z > 0, z, a2 * z)
    o = jnp.einsum('nhwg,go->nhwo', z, w3)
    o = o * s3 + b3
    return jnp.transpose(o, (0, 3, 1, 2))


# ------------------------------- main ----------------------------------------
if __name__ == "__main__":
    key = jax.random.PRNGKey(0)
    keys = jax.random.split(key, 20)

    x = jax.random.normal(keys[0], (N, IN_C, H, W), jnp.float32)

    # stage 1: 1x1 conv (torch weight (GROUPS, IN_C, 1, 1) stored as (IN_C, GROUPS))
    w1 = 0.2 * jax.random.normal(keys[1], (IN_C, GROUPS), jnp.float32)
    s1, b1 = _fold_bn(
        1.0 + 0.1 * jax.random.normal(keys[2], (GROUPS,), jnp.float32),
        0.1 * jax.random.normal(keys[3], (GROUPS,), jnp.float32),
        0.1 * jax.random.normal(keys[4], (GROUPS,), jnp.float32),
        jax.random.uniform(keys[5], (GROUPS,), jnp.float32, 0.5, 1.5))
    a1 = 0.25 + 0.05 * jax.random.normal(keys[6], (GROUPS,), jnp.float32)

    # stage 2: depthwise 3x3 (torch weight (GROUPS, 1, 3, 3) stored as (3, 3, GROUPS))
    wd = 0.2 * jax.random.normal(keys[7], (KH, KW, GROUPS), jnp.float32)
    s2, b2 = _fold_bn(
        1.0 + 0.1 * jax.random.normal(keys[8], (GROUPS,), jnp.float32),
        0.1 * jax.random.normal(keys[9], (GROUPS,), jnp.float32),
        0.1 * jax.random.normal(keys[10], (GROUPS,), jnp.float32),
        jax.random.uniform(keys[11], (GROUPS,), jnp.float32, 0.5, 1.5))
    a2 = 0.25 + 0.05 * jax.random.normal(keys[12], (GROUPS,), jnp.float32)

    # stage 3: 1x1 conv (torch weight (OUT_C, GROUPS, 1, 1) stored as (GROUPS, OUT_C))
    w3 = 0.2 * jax.random.normal(keys[13], (GROUPS, OUT_C), jnp.float32)
    s3, b3 = _fold_bn(
        1.0 + 0.1 * jax.random.normal(keys[14], (OUT_C,), jnp.float32),
        0.1 * jax.random.normal(keys[15], (OUT_C,), jnp.float32),
        0.1 * jax.random.normal(keys[16], (OUT_C,), jnp.float32),
        jax.random.uniform(keys[17], (OUT_C,), jnp.float32, 0.5, 1.5))

    params = (w1, s1, b1, a1, wd, s2, b2, a2, w3, s3, b3)

    out = depthwise_forward(x, params)
    out = jax.block_until_ready(out)
    assert out.shape == (N, OUT_C, HO, WO), out.shape

    ref = ref_forward(x, params)
    err = float(jnp.max(jnp.abs(out - ref)))
    if err > 1e-3:
        raise AssertionError(f"Pallas kernel mismatch vs reference, max abs err = {err}")

    print("KERNEL_OK")
</pallas_src>

<mosaic_0001>
module attributes {stable_mosaic.version = 11 : i64} {
  func.func @_depthwise_kernel(%arg0: i32, %arg1: memref<9x256xf32, #tpu.memory_space<vmem>>, %arg2: memref<16x32xf32, #tpu.memory_space<vmem>>, %arg3: memref<8x128xf32, #tpu.memory_space<vmem>>, %arg4: memref<16x320xf32, #tpu.memory_space<vmem>>) attributes {dimension_semantics = [#tpu.dimension_semantics<arbitrary>], iteration_bounds = array<i64: 1>, scalar_prefetch = 0 : i64, scratch_operands = 1 : i64, tpu.core_type = #tpu.core_type<tc>, window_params = [{pipeline_mode = #tpu.pipeline_mode<synchronous>, transform_indices = @transform_0, window_bounds = array<i64: 9, 256>}, {pipeline_mode = #tpu.pipeline_mode<synchronous>, transform_indices = @transform_1, window_bounds = array<i64: 16, 32>}, {pipeline_mode = #tpu.pipeline_mode<synchronous>, transform_indices = @transform_2, window_bounds = array<i64: 8, 128>}]} {
    %c0 = arith.constant 0 : index
    %c0_0 = arith.constant 0 : index
    %0 = vector.load %arg2[%c0, %c0_0] : memref<16x32xf32, #tpu.memory_space<vmem>>, vector<16x32xf32>
    %1 = vector.extract_strided_slice %0 {offsets = [0, 0], sizes = [16, 9], strides = [1, 1]} : vector<16x32xf32> to vector<16x9xf32>
    %2 = vector.extract_strided_slice %0 {offsets = [0, 9], sizes = [16, 9], strides = [1, 1]} : vector<16x32xf32> to vector<16x9xf32>
    %3 = vector.extract_strided_slice %0 {offsets = [0, 18], sizes = [16, 1], strides = [1, 1]} : vector<16x32xf32> to vector<16x1xf32>
    %4 = vector.extract_strided_slice %0 {offsets = [0, 19], sizes = [16, 1], strides = [1, 1]} : vector<16x32xf32> to vector<16x1xf32>
    %5 = vector.extract_strided_slice %0 {offsets = [0, 20], sizes = [16, 1], strides = [1, 1]} : vector<16x32xf32> to vector<16x1xf32>
    %6 = vector.extract_strided_slice %0 {offsets = [0, 21], sizes = [8, 8], strides = [1, 1]} : vector<16x32xf32> to vector<8x8xf32>
    %7 = vector.extract_strided_slice %0 {offsets = [0, 29], sizes = [8, 1], strides = [1, 1]} : vector<16x32xf32> to vector<8x1xf32>
    %c0_1 = arith.constant 0 : index
    %c0_2 = arith.constant 0 : index
    %8 = vector.load %arg1[%c0_1, %c0_2] : memref<9x256xf32, #tpu.memory_space<vmem>>, vector<9x256xf32>
    %cst = arith.constant dense<0.000000e+00> : vector<16x256xf32>
    %9 = tpu.matmul %1, %8, %cst {dimension_numbers = #tpu.dot_dimension_numbers<[1], [0], [0], [1], [0, 0, 1, 1], [], []>} : vector<16x9xf32>, vector<9x256xf32>, vector<16x256xf32> -> vector<16x256xf32>
    %cst_3 = arith.constant 0.000000e+00 : f32
    %10 = vector.broadcast %cst_3 : f32 to vector<16x256xf32>
    %11 = arith.cmpf ogt, %9, %10 : vector<16x256xf32>
    %12 = vector.broadcast %4 : vector<16x1xf32> to vector<16x256xf32>
    %13 = arith.mulf %12, %9 : vector<16x256xf32>
    %14 = arith.select %11, %9, %13 : vector<16x256xi1>, vector<16x256xf32>
    %cst_4 = arith.constant 0.000000e+00 : f32
    %15 = vector.broadcast %cst_4 : f32 to vector<16x320xf32>
    %c0_5 = arith.constant 0 : index
    %c0_6 = arith.constant 0 : index
    %16 = vector.load %arg4[%c0_5, %c0_6] : memref<16x320xf32, #tpu.memory_space<vmem>>, vector<16x320xf32>
    tpu.vector_store %arg4[%c0_5, %c0_6], %15 {strides = array<i32>} : memref<16x320xf32, #tpu.memory_space<vmem>>, vector<16x320xf32>,
    %c0_7 = arith.constant 0 : index
    %c32 = arith.constant 32 : index
    %17 = vector.load %arg4[%c0_7, %c32] : memref<16x320xf32, #tpu.memory_space<vmem>>, vector<16x256xf32>
    tpu.vector_store %arg4[%c0_7, %c32], %14 {strides = array<i32>} : memref<16x320xf32, #tpu.memory_space<vmem>>, vector<16x256xf32>,
    %18 = tpu.iota {dimensions = array<i32: 0>} : vector<256x64xi32>
    %19 = tpu.iota {dimensions = array<i32: 1>} : vector<256x64xi32>
    %c7_i32 = arith.constant 7 : i32
    %20 = vector.broadcast %c7_i32 : i32 to vector<256x64xi32>
    %21 = arith.andi %19, %20 : vector<256x64xi32>
    %c3_i32 = arith.constant 3 : i32
    %22 = vector.broadcast %c3_i32 : i32 to vector<256x64xi32>
    %23 = arith.shrsi %19, %22 : vector<256x64xi32>
    %c32_i32 = arith.constant 32 : i32
    %24 = vector.broadcast %c32_i32 : i32 to vector<256x64xi32>
    %25 = arith.muli %23, %24 : vector<256x64xi32>
    %c2_i32 = arith.constant 2 : i32
    %26 = vector.broadcast %c2_i32 : i32 to vector<256x64xi32>
    %27 = arith.muli %26, %21 : vector<256x64xi32>
    %28 = arith.addi %25, %27 : vector<256x64xi32>
    %29 = arith.cmpi eq, %18, %28 : vector<256x64xi32>
    %30 = arith.extui %29 : vector<256x64xi1> to vector<256x64xi32>
    %31 = arith.sitofp %30 : vector<256x64xi32> to vector<256x64xf32>
    %c0_i32 = arith.constant 0 : i32
    %32 = vector.broadcast %c0_i32 : i32 to vector<256x64xi32>
    %33 = arith.cmpi ne, %21, %32 : vector<256x64xi32>
    %cst_8 = arith.constant 0.000000e+00 : f32
    %34 = vector.broadcast %cst_8 : f32 to vector<256x64xf32>
    %35 = arith.select %33, %31, %34 : vector<256x64xi1>, vector<256x64xf32>
    %cst_9 = arith.constant 0.000000e+00 : f32
    %36 = vector.broadcast %cst_9 : f32 to vector<16x64xf32>
    %c0_10 = arith.constant 0 : index
    %c15 = arith.constant 15 : index
    %37 = vector.load %arg4[%c0_10, %c15] : memref<16x320xf32, #tpu.memory_space<vmem>>, vector<16x256xf32>
    %cst_11 = arith.constant dense<0.000000e+00> : vector<16x64xf32>
    %38 = tpu.matmul %37, %35, %cst_11 {dimension_numbers = #tpu.dot_dimension_numbers<[1], [0], [0], [1], [0, 0, 1, 1], [], []>} : vector<16x256xf32>, vector<256x64xf32>, vector<16x64xf32> -> vector<16x64xf32>
    %39 = vector.extract_strided_slice %2 {offsets = [0, 0], sizes = [16, 1], strides = [1, 1]} : vector<16x9xf32> to vector<16x1xf32>
    %40 = vector.broadcast %39 : vector<16x1xf32> to vector<16x64xf32>
    %41 = arith.mulf %38, %40 : vector<16x64xf32>
    %42 = arith.addf %36, %41 : vector<16x64xf32>
    %c0_12 = arith.constant 0 : index
    %c16 = arith.constant 16 : index
    %43 = vector.load %arg4[%c0_12, %c16] : memref<16x320xf32, #tpu.memory_space<vmem>>, vector<16x256xf32>
    %cst_13 = arith.constant dense<0.000000e+00> : vector<16x64xf32>
    %44 = tpu.matmul %43, %31, %cst_13 {dimension_numbers = #tpu.dot_dimension_numbers<[1], [0], [0], [1], [0, 0, 1, 1], [], []>} : vector<16x256xf32>, vector<256x64xf32>, vector<16x64xf32> -> vector<16x64xf32>
    %45 = vector.extract_strided_slice %2 {offsets = [0, 1], sizes = [16, 1], strides = [1, 1]} : vector<16x9xf32> to vector<16x1xf32>
    %46 = vector.broadcast %45 : vector<16x1xf32> to vector<16x64xf32>
    %47 = arith.mulf %44, %46 : vector<16x64xf32>
    %48 = arith.addf %42, %47 : vector<16x64xf32>
    %c0_14 = arith.constant 0 : index
    %c17 = arith.constant 17 : index
    %49 = vector.load %arg4[%c0_14, %c17] : memref<16x320xf32, #tpu.memory_space<vmem>>, vector<16x256xf32>
    %cst_15 = arith.constant dense<0.000000e+00> : vector<16x64xf32>
    %50 = tpu.matmul %49, %31, %cst_15 {dimension_numbers = #tpu.dot_dimension_numbers<[1], [0], [0], [1], [0, 0, 1, 1], [], []>} : vector<16x256xf32>, vector<256x64xf32>, vector<16x64xf32> -> vector<16x64xf32>
    %51 = vector.extract_strided_slice %2 {offsets = [0, 2], sizes = [16, 1], strides = [1, 1]} : vector<16x9xf32> to vector<16x1xf32>
    %52 = vector.broadcast %51 : vector<16x1xf32> to vector<16x64xf32>
    %53 = arith.mulf %50, %52 : vector<16x64xf32>
    %54 = arith.addf %48, %53 : vector<16x64xf32>
    %c0_16 = arith.constant 0 : index
    %c31 = arith.constant 31 : index
    %55 = vector.load %arg4[%c0_16, %c31] : memref<16x320xf32, #tpu.memory_space<vmem>>, vector<16x256xf32>
    %cst_17 = arith.constant dense<0.000000e+00> : vector<16x64xf32>
    %56 = tpu.matmul %55, %35, %cst_17 {dimension_numbers = #tpu.dot_dimension_numbers<[1], [0], [0], [1], [0, 0, 1, 1], [], []>} : vector<16x256xf32>, vector<256x64xf32>, vector<16x64xf32> -> vector<16x64xf32>
    %57 = vector.extract_strided_slice %2 {offsets = [0, 3], sizes = [16, 1], strides = [1, 1]} : vector<16x9xf32> to vector<16x1xf32>
    %58 = vector.broadcast %57 : vector<16x1xf32> to vector<16x64xf32>
    %59 = arith.mulf %56, %58 : vector<16x64xf32>
    %60 = arith.addf %54, %59 : vector<16x64xf32>
    %c0_18 = arith.constant 0 : index
    %c32_19 = arith.constant 32 : index
    %61 = vector.load %arg4[%c0_18, %c32_19] : memref<16x320xf32, #tpu.memory_space<vmem>>, vector<16x256xf32>
    %cst_20 = arith.constant dense<0.000000e+00> : vector<16x64xf32>
    %62 = tpu.matmul %61, %31, %cst_20 {dimension_numbers = #tpu.dot_dimension_numbers<[1], [0], [0], [1], [0, 0, 1, 1], [], []>} : vector<16x256xf32>, vector<256x64xf32>, vector<16x64xf32> -> vector<16x64xf32>
    %63 = vector.extract_strided_slice %2 {offsets = [0, 4], sizes = [16, 1], strides = [1, 1]} : vector<16x9xf32> to vector<16x1xf32>
    %64 = vector.broadcast %63 : vector<16x1xf32> to vector<16x64xf32>
    %65 = arith.mulf %62, %64 : vector<16x64xf32>
    %66 = arith.addf %60, %65 : vector<16x64xf32>
    %c0_21 = arith.constant 0 : index
    %c33 = arith.constant 33 : index
    %67 = vector.load %arg4[%c0_21, %c33] : memref<16x320xf32, #tpu.memory_space<vmem>>, vector<16x256xf32>
    %cst_22 = arith.constant dense<0.000000e+00> : vector<16x64xf32>
    %68 = tpu.matmul %67, %31, %cst_22 {dimension_numbers = #tpu.dot_dimension_numbers<[1], [0], [0], [1], [0, 0, 1, 1], [], []>} : vector<16x256xf32>, vector<256x64xf32>, vector<16x64xf32> -> vector<16x64xf32>
    %69 = vector.extract_strided_slice %2 {offsets = [0, 5], sizes = [16, 1], strides = [1, 1]} : vector<16x9xf32> to vector<16x1xf32>
    %70 = vector.broadcast %69 : vector<16x1xf32> to vector<16x64xf32>
    %71 = arith.mulf %68, %70 : vector<16x64xf32>
    %72 = arith.addf %66, %71 : vector<16x64xf32>
    %c0_23 = arith.constant 0 : index
    %c47 = arith.constant 47 : index
    %73 = vector.load %arg4[%c0_23, %c47] : memref<16x320xf32, #tpu.memory_space<vmem>>, vector<16x256xf32>
    %cst_24 = arith.constant dense<0.000000e+00> : vector<16x64xf32>
    %74 = tpu.matmul %73, %35, %cst_24 {dimension_numbers = #tpu.dot_dimension_numbers<[1], [0], [0], [1], [0, 0, 1, 1], [], []>} : vector<16x256xf32>, vector<256x64xf32>, vector<16x64xf32> -> vector<16x64xf32>
    %75 = vector.extract_strided_slice %2 {offsets = [0, 6], sizes = [16, 1], strides = [1, 1]} : vector<16x9xf32> to vector<16x1xf32>
    %76 = vector.broadcast %75 : vector<16x1xf32> to vector<16x64xf32>
    %77 = arith.mulf %74, %76 : vector<16x64xf32>
    %78 = arith.addf %72, %77 : vector<16x64xf32>
    %c0_25 = arith.constant 0 : index
    %c48 = arith.constant 48 : index
    %79 = vector.load %arg4[%c0_25, %c48] : memref<16x320xf32, #tpu.memory_space<vmem>>, vector<16x256xf32>
    %cst_26 = arith.constant dense<0.000000e+00> : vector<16x64xf32>
    %80 = tpu.matmul %79, %31, %cst_26 {dimension_numbers = #tpu.dot_dimension_numbers<[1], [0], [0], [1], [0, 0, 1, 1], [], []>} : vector<16x256xf32>, vector<256x64xf32>, vector<16x64xf32> -> vector<16x64xf32>
    %81 = vector.extract_strided_slice %2 {offsets = [0, 7], sizes = [16, 1], strides = [1, 1]} : vector<16x9xf32> to vector<16x1xf32>
    %82 = vector.broadcast %81 : vector<16x1xf32> to vector<16x64xf32>
    %83 = arith.mulf %80, %82 : vector<16x64xf32>
    %84 = arith.addf %78, %83 : vector<16x64xf32>
    %c0_27 = arith.constant 0 : index
    %c49 = arith.constant 49 : index
    %85 = vector.load %arg4[%c0_27, %c49] : memref<16x320xf32, #tpu.memory_space<vmem>>, vector<16x256xf32>
    %cst_28 = arith.constant dense<0.000000e+00> : vector<16x64xf32>
    %86 = tpu.matmul %85, %31, %cst_28 {dimension_numbers = #tpu.dot_dimension_numbers<[1], [0], [0], [1], [0, 0, 1, 1], [], []>} : vector<16x256xf32>, vector<256x64xf32>, vector<16x64xf32> -> vector<16x64xf32>
    %87 = vector.extract_strided_slice %2 {offsets = [0, 8], sizes = [16, 1], strides = [1, 1]} : vector<16x9xf32> to vector<16x1xf32>
    %88 = vector.broadcast %87 : vector<16x1xf32> to vector<16x64xf32>
    %89 = arith.mulf %86, %88 : vector<16x64xf32>
    %90 = arith.addf %84, %89 : vector<16x64xf32>
    %91 = vector.broadcast %3 : vector<16x1xf32> to vector<16x64xf32>
    %92 = arith.addf %90, %91 : vector<16x64xf32>
    %cst_29 = arith.constant 0.000000e+00 : f32
    %93 = vector.broadcast %cst_29 : f32 to vector<16x64xf32>
    %94 = arith.cmpf ogt, %92, %93 : vector<16x64xf32>
    %95 = vector.broadcast %5 : vector<16x1xf32> to vector<16x64xf32>
    %96 = arith.mulf %95, %92 : vector<16x64xf32>
    %97 = arith.select %94, %92, %96 : vector<16x64xi1>, vector<16x64xf32>
    %98 = vector.extract_strided_slice %97 {offsets = [0, 0], sizes = [8, 64], strides = [1, 1]} : vector<16x64xf32> to vector<8x64xf32>
    %cst_30 = arith.constant dense<0.000000e+00> : vector<8x64xf32>
    %99 = tpu.matmul %6, %98, %cst_30 {dimension_numbers = #tpu.dot_dimension_numbers<[1], [0], [0], [1], [0, 0, 1, 1], [], []>} : vector<8x8xf32>, vector<8x64xf32>, vector<8x64xf32> -> vector<8x64xf32>
    %100 = vector.broadcast %7 : vector<8x1xf32> to vector<8x64xf32>
    %101 = arith.addf %99, %100 : vector<8x64xf32>
    %102 = vector.extract_strided_slice %97 {offsets = [8, 0], sizes = [8, 64], strides = [1, 1]} : vector<16x64xf32> to vector<8x64xf32>
    %cst_31 = arith.constant dense<0.000000e+00> : vector<8x64xf32>
    %103 = tpu.matmul %6, %102, %cst_31 {dimension_numbers = #tpu.dot_dimension_numbers<[1], [0], [0], [1], [0, 0, 1, 1], [], []>} : vector<8x8xf32>, vector<8x64xf32>, vector<8x64xf32> -> vector<8x64xf32>
    %104 = vector.broadcast %7 : vector<8x1xf32> to vector<8x64xf32>
    %105 = arith.addf %103, %104 : vector<8x64xf32>
    %106 = tpu.concatenate %101, %105 in 1 : vector<8x64xf32>, vector<8x64xf32> -> vector<8x128xf32>
    %c0_32 = arith.constant 0 : index
    %c0_33 = arith.constant 0 : index
    %107 = vector.load %arg3[%c0_32, %c0_33] : memref<8x128xf32, #tpu.memory_space<vmem>>, vector<8x128xf32>
    tpu.vector_store %arg3[%c0_32, %c0_33], %106 {strides = array<i32>} : memref<8x128xf32, #tpu.memory_space<vmem>>, vector<8x128xf32>,
    return
  }
  func.func @transform_0(%arg0: i32) -> (i32, i32) {
    %c0_i32 = arith.constant 0 : i32
    %c0_i32_0 = arith.constant 0 : i32
    %c0_i32_1 = arith.constant 0 : i32
    return %c0_i32, %c0_i32_0 : i32, i32
  }
  func.func @transform_1(%arg0: i32) -> (i32, i32) {
    %c0_i32 = arith.constant 0 : i32
    %c0_i32_0 = arith.constant 0 : i32
    %c0_i32_1 = arith.constant 0 : i32
    return %c0_i32, %c0_i32_0 : i32, i32
  }
  func.func @transform_2(%arg0: i32) -> (i32, i32) {
    %c0_i32 = arith.constant 0 : i32
    %c0_i32_0 = arith.constant 0 : i32
    %c0_i32_1 = arith.constant 0 : i32
    return %c0_i32, %c0_i32_0 : i32, i32
  }
}

</mosaic_0001>

<llo_original>
// kernel: tile.28
$region0: #{tile.28}
  #allocation0 [shape = 's32[1]{0}', space=sflag, size = 0x4, scoped, tag = 'scoped memory for tile.28']
  %s0 = inlined_call_operand.vmem [shape: f32[8], index: 0, kind: input, shape index: {}]
  %s1 = inlined_call_operand.vmem [shape: f32[2,8], index: 1, kind: output, shape index: {}]
  // Predicated region
  $region2: #{tile.28} parent=0 // pred_check
    _
  $region3: #{tile.28} parent=0 // pred_check_branch
    %3 = sbr.rel (0) target = $region5
  $region4: #{tile.28} parent=0 // pred_region
    _
  $region5: #{tile.28} parent=0 // pred_fallthru
    _
  %v4 = vld [vmem:[%s0] ss:$0 sm:$0xff]
  %5 = vst [vmem:[%s1] sm:$0x3] %v4

// kernel: depthwise_forward.1
$region0: #{depthwise_forward.1}
  #allocation0 [shape = 'u32[]', space=smem, size = 0x4, offset = 0x4, fixed_abs, tag = 'smem constant byte address 0x4 - core index']
  #allocation1 [shape = 'u32[144,128]{1,0:T(1,128)}', space=vmem, size = 0x12000, scoped, tag = 'internal scratch']
  #allocation2 [shape = 'f32[16,320]{1,0:T(8,128)}', space=vmem, size = 0x6000, scoped, tag = 'scratch operand']
  %s0 = inlined_call_operand.vmem [shape: f32[9,256], index: 0, kind: input, shape index: {}]
  %s1 = inlined_call_operand.vmem [shape: f32[16,32], index: 1, kind: input, shape index: {}]
  %s2 = inlined_call_operand.vmem [shape: f32[8,128], index: 2, kind: output, shape index: {}]
  %s3 = sld [smem:[#allocation0]]
  $region18: #{depthwise_forward.1} parent=0
    _
  %s5 = ssub.s32 1, %s3
  %s6 = scalar_select 0, %s5, %s3
  // Predicated region
  $region2: #{depthwise_forward.1} parent=0 // pred_check
    _
  $region3: #{depthwise_forward.1} parent=0 // pred_check_branch
    %8 = sbr.rel (0) target = $region5
  $region4: #{depthwise_forward.1} parent=0 // pred_region
    _
  $region5: #{depthwise_forward.1} parent=0 // pred_fallthru
    _
  // Predicated region
  $region6: #{depthwise_forward.1} parent=0 // pred_check
    _
  $region7: #{depthwise_forward.1} parent=0 // pred_check_branch
    %10 = sbr.rel (0) target = $region9
  $region8: #{depthwise_forward.1} parent=0 // pred_region
    _
  $region9: #{depthwise_forward.1} parent=0 // pred_fallthru
    _
  %v11 = vld [vmem:[%s1] sm:$0xff]
  %v12 = vld [vmem:[%s1 + $0x8] sm:$0xff]
  %v13 = vld [vmem:[%s0] sm:$0xff]
  %v14 = vld [vmem:[%s0 + $0x8] sm:$0xff]
  %v15 = vld [vmem:[%s0 + $0x10] sm:$0x1]
  %v16 = vld [vmem:[%s0 + $0x18] sm:$0x1]
  %vm17 = vcmask 72704
  %v19 = vsel %vm17, %v11, 0
  %v22 = vsel %vm17, %v12, 0
  %vm24 = vcmask 1040384
  %v26 = vsel %vm24, %v15, 0
  %v29 = vsel %vm24, %v16, 0
  %31 = vmatprep.subr.mxu0 %v14
  %32 = vmatpush1.msra.mxu0 %v13
  %33 = vmatprep.subr.mxu0 %v29
  %34 = vmatpush1.msra.mxu0 %v26
  %35 = vmatprep.subr.mxu0 0.0
  %36 = vmatpush1.msra.mxu0 0.0
  %37 = vmatprep.subr.mxu0 0.0
  %38 = vmatpush1.msra.mxu0 0.0
  %39 = vmatprep.subr.mxu0 0.0
  %40 = vmatpush1.msra.mxu0 0.0
  %41 = vmatprep.subr.mxu0 0.0
  %42 = vmatpush1.msra.mxu0 0.0
  %43 = vmatprep.subr.mxu0 0.0
  %44 = vmatpush1.msra.mxu0 0.0
  %45 = vmatprep.subr.mxu0 0.0
  %46 = vmatpush1.msra.mxu0 0.0
  %47 = vmatprep.subr.mxu0 0.0
  %48 = vmatpush1.msra.mxu0 0.0
  %49 = vmatprep.subr.mxu0 0.0
  %50 = vmatpush1.msra.mxu0 0.0
  %51 = vmatprep.subr.mxu0 0.0
  %52 = vmatpush1.msra.mxu0 0.0
  %53 = vmatprep.subr.mxu0 0.0
  %54 = vmatpush1.msra.mxu0 0.0
  %55 = vmatprep.subr.mxu0 0.0
  %56 = vmatpush1.msra.mxu0 0.0
  %57 = vmatprep.subr.mxu0 0.0
  %58 = vmatpush1.msra.mxu0 0.0
  %59 = vmatprep.subr.mxu0 0.0
  %60 = vmatpush1.msra.mxu0 0.0
  %61 = vmatprep.subr.mxu0 0.0
  %62 = vmatpush1.msra.mxu0 0.0
  %63 = vmatprep.subr.mxu0 0.0
  %64 = vmatpush1.msra.mxu0 0.0
  %65 = vmatprep.subr.mxu0 0.0
  %66 = vmatpush1.msra.mxu0 0.0
  %67 = vmatprep.subr.mxu0 0.0
  %68 = vmatpush1.msra.mxu0 0.0
  %69 = vmatprep.subr.mxu0 0.0
  %70 = vmatpush1.msra.mxu0 0.0
  %71 = vmatprep.subr.mxu0 0.0
  %72 = vmatpush1.msra.mxu0 0.0
  %73 = vmatprep.subr.mxu0 0.0
  %74 = vmatpush1.msra.mxu0 0.0
  %75 = vmatprep.subr.mxu0 0.0
  %76 = vmatpush1.msra.mxu0 0.0
  %77 = vmatprep.subr.mxu0 0.0
  %78 = vmatpush1.msra.mxu0 0.0
  %79 = vmatprep.subr.mxu0 0.0
  %80 = vmatpush1.msra.mxu0 0.0
  %81 = vmatprep.subr.mxu0 0.0
  %82 = vmatpush1.msra.mxu0 0.0
  %83 = vmatprep.subr.mxu0 0.0
  %84 = vmatpush1.msra.mxu0 0.0
  %85 = vmatprep.subr.mxu0 0.0
  %86 = vmatpush1.msra.mxu0 0.0
  %87 = vmatprep.subr.mxu0 0.0
  %88 = vmatpush1.msra.mxu0 0.0
  %89 = vmatprep.subr.mxu0 0.0
  %90 = vmatpush1.msra.mxu0 0.0
  %91 = vmatprep.subr.mxu0 0.0
  %92 = vmatpush1.msra.mxu0 0.0
  %93 = vmatprep.subr.mxu0 0.0
  %94 = vmatpush1.msra.mxu0 0.0
  %95 = vmatprep.mubr.f32.mxu0 0.0
  %96 = vmatmul.mubr.f32.gmra.mrb[0].mxu0 %v19
  %v97 = vpop.f32.mrb[0].mxu0
  %v98 = vadd.f32 0.0, %v97
  %v99 = vpop.f32.mrb[0].mxu0
  %v100 = vadd.f32 0.0, %v99
  %101 = vmatprep.mubr.f32.mxu0 0.0
  %102 = vmatmul.mubr.f32.gmra.mrb[0].mxu0 %v22
  %v103 = vpop.f32.mrb[0].mxu0
  %v104 = vadd.f32 0.0, %v103
  %v105 = vpop.f32.mrb[0].mxu0
  %v106 = vadd.f32 0.0, %v105
  %107 = vdwg.mxu0
  %vm108 = vcmp.gt.f32.partialorder %v98, 0.0
  %vm109 = vcmp.gt.f32.partialorder %v100, 0.0
  %vm110 = vcmp.gt.f32.partialorder %v104, 0.0
  %vm111 = vcmp.gt.f32.partialorder %v106, 0.0
  %112 = vset.pattern.permute.xlu0 19
  %113 = vperm.xlu0 %112, %v11
  %v114 = vpop.permute.xlu0 %113
  %116 = vset.pattern.permute.xlu0 19
  %117 = vperm.xlu0 %116, %v12
  %v118 = vpop.permute.xlu0 %117
  %v120 = vmul.f32 %v114, %v98
  %v121 = vmul.f32 %v114, %v100
  %v122 = vmul.f32 %v118, %v104
  %v123 = vmul.f32 %v118, %v106
  %v124 = vsel %vm108, %v98, %v120
  %v125 = vsel %vm109, %v100, %v121
  %v126 = vsel %vm110, %v104, %v122
  %v127 = vsel %vm111, %v106, %v123
  %128 = vst [vmem:[#allocation2] sm:$0xff] 0.0
  %129 = vst [vmem:[#allocation2 + $0x8] sm:$0xff] 0.0
  %vm130 = vcmask 523264
  %131 = vst.msk [vmem:[#allocation2 + $0x10] sm:$0xff] %vm130, 0.0
  %132 = vst [vmem:[#allocation2 + $0x18] sm:$0xff] 0.0
  %133 = vst [vmem:[#allocation2 + $0x20] sm:$0xff] 0.0
  %134 = vst.msk [vmem:[#allocation2 + $0x28] sm:$0xff] %vm130, 0.0
  %139 = vrot.lane.b32.xlu0 %v124, 32
  %v140 = vpop.permute.xlu0 %139
  %141 = vrot.lane.b32.xlu0 %v125, 32
  %v142 = vpop.permute.xlu0 %141
  %143 = vrot.lane.b32.xlu0 %v126, 32
  %v144 = vpop.permute.xlu0 %143
  %145 = vrot.lane.b32.xlu0 %v127, 32
  %v146 = vpop.permute.xlu0 %145
  %vm147 = vcmask 261120
  %v148 = vsel %vm147, %v140, %v142
  %v149 = vsel %vm147, %v144, %v146
  %vm156 = vcmask 1047808
  %157 = vst.msk [vmem:[#allocation2] sm:$0xff] %vm156, %v140
  %158 = vst [vmem:[#allocation2 + $0x8] sm:$0xff] %v148
  %159 = vst.msk [vmem:[#allocation2 + $0x10] sm:$0xff] %vm147, %v142
  %160 = vst.msk [vmem:[#allocation2 + $0x18] sm:$0xff] %vm156, %v144
  %161 = vst [vmem:[#allocation2 + $0x20] sm:$0xff] %v149
  %162 = vst.msk [vmem:[#allocation2 + $0x28] sm:$0xff] %vm147, %v146
  %v163 = vlaneseq
  %v164 = vshrl.u32 %v163, 7
  %v165 = vadd.s32 %v164, 8
  %v166 = vadd.s32 %v164, 16
  %v167 = vadd.s32 %v164, 24
  %v168 = vadd.s32 %v164, 32
  %v169 = vadd.s32 %v164, 40
  %v170 = vadd.s32 %v164, 48
  %v171 = vadd.s32 %v164, 56
  %v172 = vadd.s32 %v164, 64
  %v173 = vadd.s32 %v164, 72
  %v174 = vadd.s32 %v164, 80
  %v175 = vadd.s32 %v164, 88
  %v176 = vadd.s32 %v164, 96
  %v177 = vadd.s32 %v164, 104
  %v178 = vadd.s32 %v164, 112
  %v179 = vadd.s32 %v164, 120
  %v180 = vadd.s32 %v164, 128
  %v181 = vadd.s32 %v164, 136
  %v182 = vadd.s32 %v164, 144
  %v183 = vadd.s32 %v164, 152
  %v184 = vadd.s32 %v164, 160
  %v185 = vadd.s32 %v164, 168
  %v186 = vadd.s32 %v164, 176
  %v187 = vadd.s32 %v164, 184
  %v188 = vadd.s32 %v164, 192
  %v189 = vadd.s32 %v164, 200
  %v190 = vadd.s32 %v164, 208
  %v191 = vadd.s32 %v164, 216
  %v192 = vadd.s32 %v164, 224
  %v193 = vadd.s32 %v164, 232
  %v194 = vadd.s32 %v164, 240
  %v195 = vadd.s32 %v164, 248
  %v196 = vlaneseq
  %v197 = vand.u32 %v196, 127
  %v198 = vand.u32 %v197, 7
  %v199 = vshra.s32 %v197, 3
  %v200 = vmul.u32 %v199, 32
  %v201 = vmul.u32 %v198, 2
  %v202 = vadd.s32 %v200, %v201
  %vm203 = vcmp.eq.s32.totalorder %v164, %v202
  %vm204 = vcmp.eq.s32.totalorder %v165, %v202
  %vm205 = vcmp.eq.s32.totalorder %v166, %v202
  %vm206 = vcmp.eq.s32.totalorder %v167, %v202
  %vm207 = vcmp.eq.s32.totalorder %v168, %v202
  %vm208 = vcmp.eq.s32.totalorder %v169, %v202
  %vm209 = vcmp.eq.s32.totalorder %v170, %v202
  %vm210 = vcmp.eq.s32.totalorder %v171, %v202
  %vm211 = vcmp.eq.s32.totalorder %v172, %v202
  %vm212 = vcmp.eq.s32.totalorder %v173, %v202
  %vm213 = vcmp.eq.s32.totalorder %v174, %v202
  %vm214 = vcmp.eq.s32.totalorder %v175, %v202
  %vm215 = vcmp.eq.s32.totalorder %v176, %v202
  %vm216 = vcmp.eq.s32.totalorder %v177, %v202
  %vm217 = vcmp.eq.s32.totalorder %v178, %v202
  %vm218 = vcmp.eq.s32.totalorder %v179, %v202
  %vm219 = vcmp.eq.s32.totalorder %v180, %v202
  %vm220 = vcmp.eq.s32.totalorder %v181, %v202
  %vm221 = vcmp.eq.s32.totalorder %v182, %v202
  %vm222 = vcmp.eq.s32.totalorder %v183, %v202
  %vm223 = vcmp.eq.s32.totalorder %v184, %v202
  %vm224 = vcmp.eq.s32.totalorder %v185, %v202
  %vm225 = vcmp.eq.s32.totalorder %v186, %v202
  %vm226 = vcmp.eq.s32.totalorder %v187, %v202
  %vm227 = vcmp.eq.s32.totalorder %v188, %v202
  %vm228 = vcmp.eq.s32.totalorder %v189, %v202
  %vm229 = vcmp.eq.s32.totalorder %v190, %v202
  %vm230 = vcmp.eq.s32.totalorder %v191, %v202
  %vm231 = vcmp.eq.s32.totalorder %v192, %v202
  %vm232 = vcmp.eq.s32.totalorder %v193, %v202
  %vm233 = vcmp.eq.s32.totalorder %v194, %v202
  %vm234 = vcmp.eq.s32.totalorder %v195, %v202
  %v235 = vsel %vm203, 1, 0
  %v236 = vsel %vm204, 1, 0
  %v237 = vsel %vm205, 1, 0
  %v238 = vsel %vm206, 1, 0
  %v239 = vsel %vm207, 1, 0
  %v240 = vsel %vm208, 1, 0
  %v241 = vsel %vm209, 1, 0
  %v242 = vsel %vm210, 1, 0
  %v243 = vsel %vm211, 1, 0
  %v244 = vsel %vm212, 1, 0
  %v245 = vsel %vm213, 1, 0
  %v246 = vsel %vm214, 1, 0
  %v247 = vsel %vm215, 1, 0
  %v248 = vsel %vm216, 1, 0
  %v249 = vsel %vm217, 1, 0
  %v250 = vsel %vm218, 1, 0
  %v251 = vsel %vm219, 1, 0
  %v252 = vsel %vm220, 1, 0
  %v253 = vsel %vm221, 1, 0
  %v254 = vsel %vm222, 1, 0
  %v255 = vsel %vm223, 1, 0
  %v256 = vsel %vm224, 1, 0
  %v257 = vsel %vm225, 1, 0
  %v258 = vsel %vm226, 1, 0
  %v259 = vsel %vm227, 1, 0
  %v260 = vsel %vm228, 1, 0
  %v261 = vsel %vm229, 1, 0
  %v262 = vsel %vm230, 1, 0
  %v263 = vsel %vm231, 1, 0
  %v264 = vsel %vm232, 1, 0
  %v265 = vsel %vm233, 1, 0
  %v266 = vsel %vm234, 1, 0
  %v267 = vcvt.s32.f32 %v235
  %v268 = vcvt.s32.f32 %v236
  %v269 = vcvt.s32.f32 %v237
  %v270 = vcvt.s32.f32 %v238
  %v271 = vcvt.s32.f32 %v239
  %v272 = vcvt.s32.f32 %v240
  %v273 = vcvt.s32.f32 %v241
  %v274 = vcvt.s32.f32 %v242
  %v275 = vcvt.s32.f32 %v243
  %v276 = vcvt.s32.f32 %v244
  %v277 = vcvt.s32.f32 %v245
  %v278 = vcvt.s32.f32 %v246
  %v279 = vcvt.s32.f32 %v247
  %v280 = vcvt.s32.f32 %v248
  %v281 = vcvt.s32.f32 %v249
  %v282 = vcvt.s32.f32 %v250
  %v283 = vcvt.s32.f32 %v251
  %v284 = vcvt.s32.f32 %v252
  %v285 = vcvt.s32.f32 %v253
  %v286 = vcvt.s32.f32 %v254
  %v287 = vcvt.s32.f32 %v255
  %v288 = vcvt.s32.f32 %v256
  %v289 = vcvt.s32.f32 %v257
  %v290 = vcvt.s32.f32 %v258
  %v291 = vcvt.s32.f32 %v259
  %v292 = vcvt.s32.f32 %v260
  %v293 = vcvt.s32.f32 %v261
  %v294 = vcvt.s32.f32 %v262
  %v295 = vcvt.s32.f32 %v263
  %v296 = vcvt.s32.f32 %v264
  %v297 = vcvt.s32.f32 %v265
  %v298 = vcvt.s32.f32 %v266
  %vm299 = vcmp.ne.s32.totalorder %v198, 0
  %v300 = vsel %vm299, %v267, 0.0
  %v301 = vsel %vm299, %v268, 0.0
  %v302 = vsel %vm299, %v269, 0.0
  %v303 = vsel %vm299, %v270, 0.0
  %v304 = vsel %vm299, %v271, 0.0
  %v305 = vsel %vm299, %v272, 0.0
  %v306 = vsel %vm299, %v273, 0.0
  %v307 = vsel %vm299, %v274, 0.0
  %v308 = vsel %vm299, %v275, 0.0
  %v309 = vsel %vm299, %v276, 0.0
  %v310 = vsel %vm299, %v277, 0.0
  %v311 = vsel %vm299, %v278, 0.0
  %v312 = vsel %vm299, %v279, 0.0
  %v313 = vsel %vm299, %v280, 0.0
  %v314 = vsel %vm299, %v281, 0.0
  %v315 = vsel %vm299, %v282, 0.0
  %v316 = vsel %vm299, %v283, 0.0
  %v317 = vsel %vm299, %v284, 0.0
  %v318 = vsel %vm299, %v285, 0.0
  %v319 = vsel %vm299, %v286, 0.0
  %v320 = vsel %vm299, %v287, 0.0
  %v321 = vsel %vm299, %v288, 0.0
  %v322 = vsel %vm299, %v289, 0.0
  %v323 = vsel %vm299, %v290, 0.0
  %v324 = vsel %vm299, %v291, 0.0
  %v325 = vsel %vm299, %v292, 0.0
  %v326 = vsel %vm299, %v293, 0.0
  %v327 = vsel %vm299, %v294, 0.0
  %v328 = vsel %vm299, %v295, 0.0
  %v329 = vsel %vm299, %v296, 0.0
  %v330 = vsel %vm299, %v297, 0.0
  %v331 = vsel %vm299, %v298, 0.0
  %v332 = vld [vmem:[#allocation2] sm:$0xff]
  %v333 = vld [vmem:[#allocation2 + $0x8] sm:$0xff]
  %v334 = vld [vmem:[#allocation2 + $0x10] sm:$0xff]
  %v335 = vld [vmem:[#allocation2 + $0x18] sm:$0xff]
  %v336 = vld [vmem:[#allocation2 + $0x20] sm:$0xff]
  %v337 = vld [vmem:[#allocation2 + $0x28] sm:$0xff]
  %344 = vrot.lane.b32.xlu0 %v332, 113
  %v345 = vpop.permute.xlu0 %344
  %346 = vrot.lane.b32.xlu0 %v333, 113
  %v347 = vpop.permute.xlu0 %346
  %348 = vrot.lane.b32.xlu0 %v334, 113
  %v349 = vpop.permute.xlu0 %348
  %350 = vrot.lane.b32.xlu0 %v335, 113
  %v351 = vpop.permute.xlu0 %350
  %352 = vrot.lane.b32.xlu0 %v336, 113
  %v353 = vpop.permute.xlu0 %352
  %354 = vrot.lane.b32.xlu0 %v337, 113
  %v355 = vpop.permute.xlu0 %354
  %vm356 = vcmask 924672
  %v357 = vsel %vm356, %v345, %v347
  %v358 = vsel %vm356, %v347, %v349
  %v359 = vsel %vm356, %v351, %v353
  %v360 = vsel %vm356, %v353, %v355
  %365 = vmatprep.subr.mxu0 0.0
  %366 = vmatpush1.msra.mxu0 %v300
  %367 = vmatprep.subr.mxu0 0.0
  %368 = vmatpush1.msra.mxu0 %v301
  %369 = vmatprep.subr.mxu0 0.0
  %370 = vmatpush1.msra.mxu0 %v302
  %371 = vmatprep.subr.mxu0 0.0
  %372 = vmatpush1.msra.mxu0 %v303
  %373 = vmatprep.subr.mxu0 0.0
  %374 = vmatpush1.msra.mxu0 %v304
  %375 = vmatprep.subr.mxu0 0.0
  %376 = vmatpush1.msra.mxu0 %v305
  %377 = vmatprep.subr.mxu0 0.0
  %378 = vmatpush1.msra.mxu0 %v306
  %379 = vmatprep.subr.mxu0 0.0
  %380 = vmatpush1.msra.mxu0 %v307
  %381 = vmatprep.subr.mxu0 0.0
  %382 = vmatpush1.msra.mxu0 %v308
  %383 = vmatprep.subr.mxu0 0.0
  %384 = vmatpush1.msra.mxu0 %v309
  %385 = vmatprep.subr.mxu0 0.0
  %386 = vmatpush1.msra.mxu0 %v310
  %387 = vmatprep.subr.mxu0 0.0
  %388 = vmatpush1.msra.mxu0 %v311
  %389 = vmatprep.subr.mxu0 0.0
  %390 = vmatpush1.msra.mxu0 %v312
  %391 = vmatprep.subr.mxu0 0.0
  %392 = vmatpush1.msra.mxu0 %v313
  %393 = vmatprep.subr.mxu0 0.0
  %394 = vmatpush1.msra.mxu0 %v314
  %395 = vmatprep.subr.mxu0 0.0
  %396 = vmatpush1.msra.mxu0 %v315
  %397 = vmatprep.subr.mxu0 0.0
  %398 = vmatpush1.msra.mxu0 %v316
  %399 = vmatprep.subr.mxu0 0.0
  %400 = vmatpush1.msra.mxu0 %v317
  %401 = vmatprep.subr.mxu0 0.0
  %402 = vmatpush1.msra.mxu0 %v318
  %403 = vmatprep.subr.mxu0 0.0
  %404 = vmatpush1.msra.mxu0 %v319
  %405 = vmatprep.subr.mxu0 0.0
  %406 = vmatpush1.msra.mxu0 %v320
  %407 = vmatprep.subr.mxu0 0.0
  %408 = vmatpush1.msra.mxu0 %v321
  %409 = vmatprep.subr.mxu0 0.0
  %410 = vmatpush1.msra.mxu0 %v322
  %411 = vmatprep.subr.mxu0 0.0
  %412 = vmatpush1.msra.mxu0 %v323
  %413 = vmatprep.subr.mxu0 0.0
  %414 = vmatpush1.msra.mxu0 %v324
  %415 = vmatprep.subr.mxu0 0.0
  %416 = vmatpush1.msra.mxu0 %v325
  %417 = vmatprep.subr.mxu0 0.0
  %418 = vmatpush1.msra.mxu0 %v326
  %419 = vmatprep.subr.mxu0 0.0
  %420 = vmatpush1.msra.mxu0 %v327
  %421 = vmatprep.subr.mxu0 0.0
  %422 = vmatpush1.msra.mxu0 %v328
  %423 = vmatprep.subr.mxu0 0.0
  %424 = vmatpush1.msra.mxu0 %v329
  %425 = vmatprep.subr.mxu0 0.0
  %426 = vmatpush1.msra.mxu0 %v330
  %427 = vmatprep.subr.mxu0 0.0
  %428 = vmatpush1.msra.mxu0 %v331
  %429 = vmatprep.mubr.f32.mxu0 %v358
  %430 = vmatmul.mubr.f32.gmra.mrb[0].mxu0 %v357
  %v431 = vpop.f32.mrb[0].mxu0
  %v432 = vadd.f32 0.0, %v431
  %v433 = vpop.f32.mrb[0].mxu0
  %434 = vmatprep.mubr.f32.mxu0 %v360
  %435 = vmatmul.mubr.f32.gmra.mrb[0].mxu0 %v359
  %v436 = vpop.f32.mrb[0].mxu0
  %v437 = vadd.f32 0.0, %v436
  %v438 = vpop.f32.mrb[0].mxu0
  %439 = vdwg.mxu0
  %440 = vset.pattern.permute.xlu0 9
  %441 = vperm.xlu0 %440, %v11
  %v442 = vpop.permute.xlu0 %441
  %444 = vset.pattern.permute.xlu0 9
  %445 = vperm.xlu0 %444, %v12
  %v446 = vpop.permute.xlu0 %445
  %v448 = vmul.f32 %v432, %v442
  %v449 = vmul.f32 %v437, %v446
  %v450 = vadd.f32 %v448, 0.0
  %v451 = vadd.f32 %v449, 0.0
  %452 = vrot.lane.b32.xlu0 %v332, 112
  %v453 = vpop.permute.xlu0 %452
  %454 = vrot.lane.b32.xlu0 %v333, 112
  %v455 = vpop.permute.xlu0 %454
  %456 = vrot.lane.b32.xlu0 %v334, 112
  %v457 = vpop.permute.xlu0 %456
  %458 = vrot.lane.b32.xlu0 %v335, 112
  %v459 = vpop.permute.xlu0 %458
  %460 = vrot.lane.b32.xlu0 %v336, 112
  %v461 = vpop.permute.xlu0 %460
  %462 = vrot.lane.b32.xlu0 %v337, 112
  %v463 = vpop.permute.xlu0 %462
  %vm464 = vcmask 916480
  %v465 = vsel %vm464, %v453, %v455
  %v466 = vsel %vm464, %v455, %v457
  %v467 = vsel %vm464, %v459, %v461
  %v468 = vsel %vm464, %v461, %v463
  %473 = vmatprep.subr.mxu0 0.0
  %474 = vmatpush1.msra.mxu0 %v267
  %475 = vmatprep.subr.mxu0 0.0
  %476 = vmatpush1.msra.mxu0 %v268
  %477 = vmatprep.subr.mxu0 0.0
  %478 = vmatpush1.msra.mxu0 %v269
  %479 = vmatprep.subr.mxu0 0.0
  %480 = vmatpush1.msra.mxu0 %v270
  %481 = vmatprep.subr.mxu0 0.0
  %482 = vmatpush1.msra.mxu0 %v271
  %483 = vmatprep.subr.mxu0 0.0
  %484 = vmatpush1.msra.mxu0 %v272
  %485 = vmatprep.subr.mxu0 0.0
  %486 = vmatpush1.msra.mxu0 %v273
  %487 = vmatprep.subr.mxu0 0.0
  %488 = vmatpush1.msra.mxu0 %v274
  %489 = vmatprep.subr.mxu0 0.0
  %490 = vmatpush1.msra.mxu0 %v275
  %491 = vmatprep.subr.mxu0 0.0
  %492 = vmatpush1.msra.mxu0 %v276
  %493 = vmatprep.subr.mxu0 0.0
  %494 = vmatpush1.msra.mxu0 %v277
  %495 = vmatprep.subr.mxu0 0.0
  %496 = vmatpush1.msra.mxu0 %v278
  %497 = vmatprep.subr.mxu0 0.0
  %498 = vmatpush1.msra.mxu0 %v279
  %499 = vmatprep.subr.mxu0 0.0
  %500 = vmatpush1.msra.mxu0 %v280
  %501 = vmatprep.subr.mxu0 0.0
  %502 = vmatpush1.msra.mxu0 %v281
  %503 = vmatprep.subr.mxu0 0.0
  %504 = vmatpush1.msra.mxu0 %v282
  %505 = vmatprep.subr.mxu0 0.0
  %506 = vmatpush1.msra.mxu0 %v283
  %507 = vmatprep.subr.mxu0 0.0
  %508 = vmatpush1.msra.mxu0 %v284
  %509 = vmatprep.subr.mxu0 0.0
  %510 = vmatpush1.msra.mxu0 %v285
  %511 = vmatprep.subr.mxu0 0.0
  %512 = vmatpush1.msra.mxu0 %v286
  %513 = vmatprep.subr.mxu0 0.0
  %514 = vmatpush1.msra.mxu0 %v287
  %515 = vmatprep.subr.mxu0 0.0
  %516 = vmatpush1.msra.mxu0 %v288
  %517 = vmatprep.subr.mxu0 0.0
  %518 = vmatpush1.msra.mxu0 %v289
  %519 = vmatprep.subr.mxu0 0.0
  %520 = vmatpush1.msra.mxu0 %v290
  %521 = vmatprep.subr.mxu0 0.0
  %522 = vmatpush1.msra.mxu0 %v291
  %523 = vmatprep.subr.mxu0 0.0
  %524 = vmatpush1.msra.mxu0 %v292
  %525 = vmatprep.subr.mxu0 0.0
  %526 = vmatpush1.msra.mxu0 %v293
  %527 = vmatprep.subr.mxu0 0.0
  %528 = vmatpush1.msra.mxu0 %v294
  %529 = vmatprep.subr.mxu0 0.0
  %530 = vmatpush1.msra.mxu0 %v295
  %531 = vmatprep.subr.mxu0 0.0
  %532 = vmatpush1.msra.mxu0 %v296
  %533 = vmatprep.subr.mxu0 0.0
  %534 = vmatpush1.msra.mxu0 %v297
  %535 = vmatprep.subr.mxu0 0.0
  %536 = vmatpush1.msra.mxu0 %v298
  %537 = vmatprep.mubr.f32.mxu0 %v466
  %538 = vmatmul.mubr.f32.gmra.mrb[0].mxu0 %v465
  %v539 = vpop.f32.mrb[0].mxu0
  %v540 = vadd.f32 0.0, %v539
  %v541 = vpop.f32.mrb[0].mxu0
  %542 = vmatprep.mubr.f32.mxu0 %v468
  %543 = vmatmul.mubr.f32.gmra.mrb[0].mxu0 %v467
  %v544 = vpop.f32.mrb[0].mxu0
  %v545 = vadd.f32 0.0, %v544
  %v546 = vpop.f32.mrb[0].mxu0
  %547 = vdwg.mxu0
  %548 = vset.pattern.permute.xlu0 10
  %549 = vperm.xlu0 %548, %v11
  %v550 = vpop.permute.xlu0 %549
  %552 = vset.pattern.permute.xlu0 10
  %553 = vperm.xlu0 %552, %v12
  %v554 = vpop.permute.xlu0 %553
  %v556 = vmul.f32 %v540, %v550
  %v557 = vmul.f32 %v545, %v554
  %v558 = vadd.f32 %v450, %v556
  %v559 = vadd.f32 %v451, %v557
  %560 = vrot.lane.b32.xlu0 %v332, 111
  %v561 = vpop.permute.xlu0 %560
  %562 = vrot.lane.b32.xlu0 %v333, 111
  %v563 = vpop.permute.xlu0 %562
  %564 = vrot.lane.b32.xlu0 %v334, 111
  %v565 = vpop.permute.xlu0 %564
  %566 = vrot.lane.b32.xlu0 %v335, 111
  %v567 = vpop.permute.xlu0 %566
  %568 = vrot.lane.b32.xlu0 %v336, 111
  %v569 = vpop.permute.xlu0 %568
  %570 = vrot.lane.b32.xlu0 %v337, 111
  %v571 = vpop.permute.xlu0 %570
  %vm572 = vcmask 908288
  %v573 = vsel %vm572, %v561, %v563
  %v574 = vsel %vm572, %v563, %v565
  %v575 = vsel %vm572, %v567, %v569
  %v576 = vsel %vm572, %v569, %v571
  %581 = vmatprep.subr.mxu0 0.0
  %582 = vmatpush1.msra.mxu0 %v267
  %583 = vmatprep.subr.mxu0 0.0
  %584 = vmatpush1.msra.mxu0 %v268
  %585 = vmatprep.subr.mxu0 0.0
  %586 = vmatpush1.msra.mxu0 %v269
  %587 = vmatprep.subr.mxu0 0.0
  %588 = vmatpush1.msra.mxu0 %v270
  %589 = vmatprep.subr.mxu0 0.0
  %590 = vmatpush1.msra.mxu0 %v271
  %591 = vmatprep.subr.mxu0 0.0
  %592 = vmatpush1.msra.mxu0 %v272
  %593 = vmatprep.subr.mxu0 0.0
  %594 = vmatpush1.msra.mxu0 %v273
  %595 = vmatprep.subr.mxu0 0.0
  %596 = vmatpush1.msra.mxu0 %v274
  %597 = vmatprep.subr.mxu0 0.0
  %598 = vmatpush1.msra.mxu0 %v275
  %599 = vmatprep.subr.mxu0 0.0
  %600 = vmatpush1.msra.mxu0 %v276
  %601 = vmatprep.subr.mxu0 0.0
  %602 = vmatpush1.msra.mxu0 %v277
  %603 = vmatprep.subr.mxu0 0.0
  %604 = vmatpush1.msra.mxu0 %v278
  %605 = vmatprep.subr.mxu0 0.0
  %606 = vmatpush1.msra.mxu0 %v279
  %607 = vmatprep.subr.mxu0 0.0
  %608 = vmatpush1.msra.mxu0 %v280
  %609 = vmatprep.subr.mxu0 0.0
  %610 = vmatpush1.msra.mxu0 %v281
  %611 = vmatprep.subr.mxu0 0.0
  %612 = vmatpush1.msra.mxu0 %v282
  %613 = vmatprep.subr.mxu0 0.0
  %614 = vmatpush1.msra.mxu0 %v283
  %615 = vmatprep.subr.mxu0 0.0
  %616 = vmatpush1.msra.mxu0 %v284
  %617 = vmatprep.subr.mxu0 0.0
  %618 = vmatpush1.msra.mxu0 %v285
  %619 = vmatprep.subr.mxu0 0.0
  %620 = vmatpush1.msra.mxu0 %v286
  %621 = vmatprep.subr.mxu0 0.0
  %622 = vmatpush1.msra.mxu0 %v287
  %623 = vmatprep.subr.mxu0 0.0
  %624 = vmatpush1.msra.mxu0 %v288
  %625 = vmatprep.subr.mxu0 0.0
  %626 = vmatpush1.msra.mxu0 %v289
  %627 = vmatprep.subr.mxu0 0.0
  %628 = vmatpush1.msra.mxu0 %v290
  %629 = vmatprep.subr.mxu0 0.0
  %630 = vmatpush1.msra.mxu0 %v291
  %631 = vmatprep.subr.mxu0 0.0
  %632 = vmatpush1.msra.mxu0 %v292
  %633 = vmatprep.subr.mxu0 0.0
  %634 = vmatpush1.msra.mxu0 %v293
  %635 = vmatprep.subr.mxu0 0.0
  %636 = vmatpush1.msra.mxu0 %v294
  %637 = vmatprep.subr.mxu0 0.0
  %638 = vmatpush1.msra.mxu0 %v295
  %639 = vmatprep.subr.mxu0 0.0
  %640 = vmatpush1.msra.mxu0 %v296
  %641 = vmatprep.subr.mxu0 0.0
  %642 = vmatpush1.msra.mxu0 %v297
  %643 = vmatprep.subr.mxu0 0.0
  %644 = vmatpush1.msra.mxu0 %v298
  %645 = vmatprep.mubr.f32.mxu0 %v574
  %646 = vmatmul.mubr.f32.gmra.mrb[0].mxu0 %v573
  %v647 = vpop.f32.mrb[0].mxu0
  %v648 = vadd.f32 0.0, %v647
  %v649 = vpop.f32.mrb[0].mxu0
  %650 = vmatprep.mubr.f32.mxu0 %v576
  %651 = vmatmul.mubr.f32.gmra.mrb[0].mxu0 %v575
  %v652 = vpop.f32.mrb[0].mxu0
  %v653 = vadd.f32 0.0, %v652
  %v654 = vpop.f32.mrb[0].mxu0
  %655 = vdwg.mxu0
  %656 = vset.pattern.permute.xlu0 11
  %657 = vperm.xlu0 %656, %v11
  %v658 = vpop.permute.xlu0 %657
  %660 = vset.pattern.permute.xlu0 11
  %661 = vperm.xlu0 %660, %v12
  %v662 = vpop.permute.xlu0 %661
  %v664 = vmul.f32 %v648, %v658
  %v665 = vmul.f32 %v653, %v662
  %v666 = vadd.f32 %v558, %v664
  %v667 = vadd.f32 %v559, %v665
  %668 = vrot.lane.b32.xlu0 %v332, 97
  %v669 = vpop.permute.xlu0 %668
  %670 = vrot.lane.b32.xlu0 %v333, 97
  %v671 = vpop.permute.xlu0 %670
  %672 = vrot.lane.b32.xlu0 %v334, 97
  %v673 = vpop.permute.xlu0 %672
  %674 = vrot.lane.b32.xlu0 %v335, 97
  %v675 = vpop.permute.xlu0 %674
  %676 = vrot.lane.b32.xlu0 %v336, 97
  %v677 = vpop.permute.xlu0 %676
  %678 = vrot.lane.b32.xlu0 %v337, 97
  %v679 = vpop.permute.xlu0 %678
  %vm680 = vcmask 793600
  %v681 = vsel %vm680, %v669, %v671
  %v682 = vsel %vm680, %v671, %v673
  %v683 = vsel %vm680, %v675, %v677
  %v684 = vsel %vm680, %v677, %v679
  %689 = vmatprep.subr.mxu0 0.0
  %690 = vmatpush1.msra.mxu0 %v300
  %691 = vmatprep.subr.mxu0 0.0
  %692 = vmatpush1.msra.mxu0 %v301
  %693 = vmatprep.subr.mxu0 0.0
  %694 = vmatpush1.msra.mxu0 %v302
  %695 = vmatprep.subr.mxu0 0.0
  %696 = vmatpush1.msra.mxu0 %v303
  %697 = vmatprep.subr.mxu0 0.0
  %698 = vmatpush1.msra.mxu0 %v304
  %699 = vmatprep.subr.mxu0 0.0
  %700 = vmatpush1.msra.mxu0 %v305
  %701 = vmatprep.subr.mxu0 0.0
  %702 = vmatpush1.msra.mxu0 %v306
  %703 = vmatprep.subr.mxu0 0.0
  %704 = vmatpush1.msra.mxu0 %v307
  %705 = vmatprep.subr.mxu0 0.0
  %706 = vmatpush1.msra.mxu0 %v308
  %707 = vmatprep.subr.mxu0 0.0
  %708 = vmatpush1.msra.mxu0 %v309
  %709 = vmatprep.subr.mxu0 0.0
  %710 = vmatpush1.msra.mxu0 %v310
  %711 = vmatprep.subr.mxu0 0.0
  %712 = vmatpush1.msra.mxu0 %v311
  %713 = vmatprep.subr.mxu0 0.0
  %714 = vmatpush1.msra.mxu0 %v312
  %715 = vmatprep.subr.mxu0 0.0
  %716 = vmatpush1.msra.mxu0 %v313
  %717 = vmatprep.subr.mxu0 0.0
  %718 = vmatpush1.msra.mxu0 %v314
  %719 = vmatprep.subr.mxu0 0.0
  %720 = vmatpush1.msra.mxu0 %v315
  %721 = vmatprep.subr.mxu0 0.0
  %722 = vmatpush1.msra.mxu0 %v316
  %723 = vmatprep.subr.mxu0 0.0
  %724 = vmatpush1.msra.mxu0 %v317
  %725 = vmatprep.subr.mxu0 0.0
  %726 = vmatpush1.msra.mxu0 %v318
  %727 = vmatprep.subr.mxu0 0.0
  %728 = vmatpush1.msra.mxu0 %v319
  %729 = vmatprep.subr.mxu0 0.0
  %730 = vmatpush1.msra.mxu0 %v320
  %731 = vmatprep.subr.mxu0 0.0
  %732 = vmatpush1.msra.mxu0 %v321
  %733 = vmatprep.subr.mxu0 0.0
  %734 = vmatpush1.msra.mxu0 %v322
  %735 = vmatprep.subr.mxu0 0.0
  %736 = vmatpush1.msra.mxu0 %v323
  %737 = vmatprep.subr.mxu0 0.0
  %738 = vmatpush1.msra.mxu0 %v324
  %739 = vmatprep.subr.mxu0 0.0
  %740 = vmatpush1.msra.mxu0 %v325
  %741 = vmatprep.subr.mxu0 0.0
  %742 = vmatpush1.msra.mxu0 %v326
  %743 = vmatprep.subr.mxu0 0.0
  %744 = vmatpush1.msra.mxu0 %v327
  %745 = vmatprep.subr.mxu0 0.0
  %746 = vmatpush1.msra.mxu0 %v328
  %747 = vmatprep.subr.mxu0 0.0
  %748 = vmatpush1.msra.mxu0 %v329
  %749 = vmatprep.subr.mxu0 0.0
  %750 = vmatpush1.msra.mxu0 %v330
  %751 = vmatprep.subr.mxu0 0.0
  %752 = vmatpush1.msra.mxu0 %v331
  %753 = vmatprep.mubr.f32.mxu0 %v682
  %754 = vmatmul.mubr.f32.gmra.mrb[0].mxu0 %v681
  %v755 = vpop.f32.mrb[0].mxu0
  %v756 = vadd.f32 0.0, %v755
  %v757 = vpop.f32.mrb[0].mxu0
  %758 = vmatprep.mubr.f32.mxu0 %v684
  %759 = vmatmul.mubr.f32.gmra.mrb[0].mxu0 %v683
  %v760 = vpop.f32.mrb[0].mxu0
  %v761 = vadd.f32 0.0, %v760
  %v762 = vpop.f32.mrb[0].mxu0
  %763 = vdwg.mxu0
  %764 = vset.pattern.permute.xlu0 12
  %765 = vperm.xlu0 %764, %v11
  %v766 = vpop.permute.xlu0 %765
  %768 = vset.pattern.permute.xlu0 12
  %769 = vperm.xlu0 %768, %v12
  %v770 = vpop.permute.xlu0 %769
  %v772 = vmul.f32 %v756, %v766
  %v773 = vmul.f32 %v761, %v770
  %v774 = vadd.f32 %v666, %v772
  %v775 = vadd.f32 %v667, %v773
  %776 = vrot.lane.b32.xlu0 %v332, 96
  %v777 = vpop.permute.xlu0 %776
  %778 = vrot.lane.b32.xlu0 %v333, 96
  %v779 = vpop.permute.xlu0 %778
  %780 = vrot.lane.b32.xlu0 %v334, 96
  %v781 = vpop.permute.xlu0 %780
  %782 = vrot.lane.b32.xlu0 %v335, 96
  %v783 = vpop.permute.xlu0 %782
  %784 = vrot.lane.b32.xlu0 %v336, 96
  %v785 = vpop.permute.xlu0 %784
  %786 = vrot.lane.b32.xlu0 %v337, 96
  %v787 = vpop.permute.xlu0 %786
  %vm788 = vcmask 785408
  %v789 = vsel %vm788, %v777, %v779
  %v790 = vsel %vm788, %v779, %v781
  %v791 = vsel %vm788, %v783, %v785
  %v792 = vsel %vm788, %v785, %v787
  %797 = vmatprep.subr.mxu0 0.0
  %798 = vmatpush1.msra.mxu0 %v267
  %799 = vmatprep.subr.mxu0 0.0
  %800 = vmatpush1.msra.mxu0 %v268
  %801 = vmatprep.subr.mxu0 0.0
  %802 = vmatpush1.msra.mxu0 %v269
  %803 = vmatprep.subr.mxu0 0.0
  %804 = vmatpush1.msra.mxu0 %v270
  %805 = vmatprep.subr.mxu0 0.0
  %806 = vmatpush1.msra.mxu0 %v271
  %807 = vmatprep.subr.mxu0 0.0
  %808 = vmatpush1.msra.mxu0 %v272
  %809 = vmatprep.subr.mxu0 0.0
  %810 = vmatpush1.msra.mxu0 %v273
  %811 = vmatprep.subr.mxu0 0.0
  %812 = vmatpush1.msra.mxu0 %v274
  %813 = vmatprep.subr.mxu0 0.0
  %814 = vmatpush1.msra.mxu0 %v275
  %815 = vmatprep.subr.mxu0 0.0
  %816 = vmatpush1.msra.mxu0 %v276
  %817 = vmatprep.subr.mxu0 0.0
  %818 = vmatpush1.msra.mxu0 %v277
  %819 = vmatprep.subr.mxu0 0.0
  %820 = vmatpush1.msra.mxu0 %v278
  %821 = vmatprep.subr.mxu0 0.0
  %822 = vmatpush1.msra.mxu0 %v279
  %823 = vmatprep.subr.mxu0 0.0
  %824 = vmatpush1.msra.mxu0 %v280
  %825 = vmatprep.subr.mxu0 0.0
  %826 = vmatpush1.msra.mxu0 %v281
  %827 = vmatprep.subr.mxu0 0.0
  %828 = vmatpush1.msra.mxu0 %v282
  %829 = vmatprep.subr.mxu0 0.0
  %830 = vmatpush1.msra.mxu0 %v283
  %831 = vmatprep.subr.mxu0 0.0
  %832 = vmatpush1.msra.mxu0 %v284
  %833 = vmatprep.subr.mxu0 0.0
  %834 = vmatpush1.msra.mxu0 %v285
  %835 = vmatprep.subr.mxu0 0.0
  %836 = vmatpush1.msra.mxu0 %v286
  %837 = vmatprep.subr.mxu0 0.0
  %838 = vmatpush1.msra.mxu0 %v287
  %839 = vmatprep.subr.mxu0 0.0
  %840 = vmatpush1.msra.mxu0 %v288
  %841 = vmatprep.subr.mxu0 0.0
  %842 = vmatpush1.msra.mxu0 %v289
  %843 = vmatprep.subr.mxu0 0.0
  %844 = vmatpush1.msra.mxu0 %v290
  %845 = vmatprep.subr.mxu0 0.0
  %846 = vmatpush1.msra.mxu0 %v291
  %847 = vmatprep.subr.mxu0 0.0
  %848 = vmatpush1.msra.mxu0 %v292
  %849 = vmatprep.subr.mxu0 0.0
  %850 = vmatpush1.msra.mxu0 %v293
  %851 = vmatprep.subr.mxu0 0.0
  %852 = vmatpush1.msra.mxu0 %v294
  %853 = vmatprep.subr.mxu0 0.0
  %854 = vmatpush1.msra.mxu0 %v295
  %855 = vmatprep.subr.mxu0 0.0
  %856 = vmatpush1.msra.mxu0 %v296
  %857 = vmatprep.subr.mxu0 0.0
  %858 = vmatpush1.msra.mxu0 %v297
  %859 = vmatprep.subr.mxu0 0.0
  %860 = vmatpush1.msra.mxu0 %v298
  %861 = vmatprep.mubr.f32.mxu0 %v790
  %862 = vmatmul.mubr.f32.gmra.mrb[0].mxu0 %v789
  %v863 = vpop.f32.mrb[0].mxu0
  %v864 = vadd.f32 0.0, %v863
  %v865 = vpop.f32.mrb[0].mxu0
  %866 = vmatprep.mubr.f32.mxu0 %v792
  %867 = vmatmul.mubr.f32.gmra.mrb[0].mxu0 %v791
  %v868 = vpop.f32.mrb[0].mxu0
  %v869 = vadd.f32 0.0, %v868
  %v870 = vpop.f32.mrb[0].mxu0
  %871 = vdwg.mxu0
  %872 = vset.pattern.permute.xlu0 13
  %873 = vperm.xlu0 %872, %v11
  %v874 = vpop.permute.xlu0 %873
  %876 = vset.pattern.permute.xlu0 13
  %877 = vperm.xlu0 %876, %v12
  %v878 = vpop.permute.xlu0 %877
  %v880 = vmul.f32 %v864, %v874
  %v881 = vmul.f32 %v869, %v878
  %v882 = vadd.f32 %v774, %v880
  %v883 = vadd.f32 %v775, %v881
  %884 = vrot.lane.b32.xlu0 %v332, 95
  %v885 = vpop.permute.xlu0 %884
  %886 = vrot.lane.b32.xlu0 %v333, 95
  %v887 = vpop.permute.xlu0 %886
  %888 = vrot.lane.b32.xlu0 %v334, 95
  %v889 = vpop.permute.xlu0 %888
  %890 = vrot.lane.b32.xlu0 %v335, 95
  %v891 = vpop.permute.xlu0 %890
  %892 = vrot.lane.b32.xlu0 %v336, 95
  %v893 = vpop.permute.xlu0 %892
  %894 = vrot.lane.b32.xlu0 %v337, 95
  %v895 = vpop.permute.xlu0 %894
  %vm896 = vcmask 777216
  %v897 = vsel %vm896, %v885, %v887
  %v898 = vsel %vm896, %v887, %v889
  %v899 = vsel %vm896, %v891, %v893
  %v900 = vsel %vm896, %v893, %v895
  %905 = vmatprep.subr.mxu0 0.0
  %906 = vmatpush1.msra.mxu0 %v267
  %907 = vmatprep.subr.mxu0 0.0
  %908 = vmatpush1.msra.mxu0 %v268
  %909 = vmatprep.subr.mxu0 0.0
  %910 = vmatpush1.msra.mxu0 %v269
  %911 = vmatprep.subr.mxu0 0.0
  %912 = vmatpush1.msra.mxu0 %v270
  %913 = vmatprep.subr.mxu0 0.0
  %914 = vmatpush1.msra.mxu0 %v271
  %915 = vmatprep.subr.mxu0 0.0
  %916 = vmatpush1.msra.mxu0 %v272
  %917 = vmatprep.subr.mxu0 0.0
  %918 = vmatpush1.msra.mxu0 %v273
  %919 = vmatprep.subr.mxu0 0.0
  %920 = vmatpush1.msra.mxu0 %v274
  %921 = vmatprep.subr.mxu0 0.0
  %922 = vmatpush1.msra.mxu0 %v275
  %923 = vmatprep.subr.mxu0 0.0
  %924 = vmatpush1.msra.mxu0 %v276
  %925 = vmatprep.subr.mxu0 0.0
  %926 = vmatpush1.msra.mxu0 %v277
  %927 = vmatprep.subr.mxu0 0.0
  %928 = vmatpush1.msra.mxu0 %v278
  %929 = vmatprep.subr.mxu0 0.0
  %930 = vmatpush1.msra.mxu0 %v279
  %931 = vmatprep.subr.mxu0 0.0
  %932 = vmatpush1.msra.mxu0 %v280
  %933 = vmatprep.subr.mxu0 0.0
  %934 = vmatpush1.msra.mxu0 %v281
  %935 = vmatprep.subr.mxu0 0.0
  %936 = vmatpush1.msra.mxu0 %v282
  %937 = vmatprep.subr.mxu0 0.0
  %938 = vmatpush1.msra.mxu0 %v283
  %939 = vmatprep.subr.mxu0 0.0
  %940 = vmatpush1.msra.mxu0 %v284
  %941 = vmatprep.subr.mxu0 0.0
  %942 = vmatpush1.msra.mxu0 %v285
  %943 = vmatprep.subr.mxu0 0.0
  %944 = vmatpush1.msra.mxu0 %v286
  %945 = vmatprep.subr.mxu0 0.0
  %946 = vmatpush1.msra.mxu0 %v287
  %947 = vmatprep.subr.mxu0 0.0
  %948 = vmatpush1.msra.mxu0 %v288
  %949 = vmatprep.subr.mxu0 0.0
  %950 = vmatpush1.msra.mxu0 %v289
  %951 = vmatprep.subr.mxu0 0.0
  %952 = vmatpush1.msra.mxu0 %v290
  %953 = vmatprep.subr.mxu0 0.0
  %954 = vmatpush1.msra.mxu0 %v291
  %955 = vmatprep.subr.mxu0 0.0
  %956 = vmatpush1.msra.mxu0 %v292
  %957 = vmatprep.subr.mxu0 0.0
  %958 = vmatpush1.msra.mxu0 %v293
  %959 = vmatprep.subr.mxu0 0.0
  %960 = vmatpush1.msra.mxu0 %v294
  %961 = vmatprep.subr.mxu0 0.0
  %962 = vmatpush1.msra.mxu0 %v295
  %963 = vmatprep.subr.mxu0 0.0
  %964 = vmatpush1.msra.mxu0 %v296
  %965 = vmatprep.subr.mxu0 0.0
  %966 = vmatpush1.msra.mxu0 %v297
  %967 = vmatprep.subr.mxu0 0.0
  %968 = vmatpush1.msra.mxu0 %v298
  %969 = vmatprep.mubr.f32.mxu0 %v898
  %970 = vmatmul.mubr.f32.gmra.mrb[0].mxu0 %v897
  %v971 = vpop.f32.mrb[0].mxu0
  %v972 = vadd.f32 0.0, %v971
  %v973 = vpop.f32.mrb[0].mxu0
  %974 = vmatprep.mubr.f32.mxu0 %v900
  %975 = vmatmul.mubr.f32.gmra.mrb[0].mxu0 %v899
  %v976 = vpop.f32.mrb[0].mxu0
  %v977 = vadd.f32 0.0, %v976
  %v978 = vpop.f32.mrb[0].mxu0
  %979 = vdwg.mxu0
  %980 = vset.pattern.permute.xlu0 14
  %981 = vperm.xlu0 %980, %v11
  %v982 = vpop.permute.xlu0 %981
  %984 = vset.pattern.permute.xlu0 14
  %985 = vperm.xlu0 %984, %v12
  %v986 = vpop.permute.xlu0 %985
  %v988 = vmul.f32 %v972, %v982
  %v989 = vmul.f32 %v977, %v986
  %v990 = vadd.f32 %v882, %v988
  %v991 = vadd.f32 %v883, %v989
  %992 = vrot.lane.b32.xlu0 %v332, 81
  %v993 = vpop.permute.xlu0 %992
  %994 = vrot.lane.b32.xlu0 %v333, 81
  %v995 = vpop.permute.xlu0 %994
  %996 = vrot.lane.b32.xlu0 %v334, 81
  %v997 = vpop.permute.xlu0 %996
  %998 = vrot.lane.b32.xlu0 %v335, 81
  %v999 = vpop.permute.xlu0 %998
  %1000 = vrot.lane.b32.xlu0 %v336, 81
  %v1001 = vpop.permute.xlu0 %1000
  %1002 = vrot.lane.b32.xlu0 %v337, 81
  %v1003 = vpop.permute.xlu0 %1002
  %vm1004 = vcmask 662528
  %v1005 = vsel %vm1004, %v993, %v995
  %v1006 = vsel %vm1004, %v995, %v997
  %v1007 = vsel %vm1004, %v999, %v1001
  %v1008 = vsel %vm1004, %v1001, %v1003
  %1013 = vmatprep.subr.mxu0 0.0
  %1014 = vmatpush1.msra.mxu0 %v300
  %1015 = vmatprep.subr.mxu0 0.0
  %1016 = vmatpush1.msra.mxu0 %v301
  %1017 = vmatprep.subr.mxu0 0.0
  %1018 = vmatpush1.msra.mxu0 %v302
  %1019 = vmatprep.subr.mxu0 0.0
  %1020 = vmatpush1.msra.mxu0 %v303
  %1021 = vmatprep.subr.mxu0 0.0
  %1022 = vmatpush1.msra.mxu0 %v304
  %1023 = vmatprep.subr.mxu0 0.0
  %1024 = vmatpush1.msra.mxu0 %v305
  %1025 = vmatprep.subr.mxu0 0.0
  %1026 = vmatpush1.msra.mxu0 %v306
  %1027 = vmatprep.subr.mxu0 0.0
  %1028 = vmatpush1.msra.mxu0 %v307
  %1029 = vmatprep.subr.mxu0 0.0
  %1030 = vmatpush1.msra.mxu0 %v308
  %1031 = vmatprep.subr.mxu0 0.0
  %1032 = vmatpush1.msra.mxu0 %v309
  %1033 = vmatprep.subr.mxu0 0.0
  %1034 = vmatpush1.msra.mxu0 %v310
  %1035 = vmatprep.subr.mxu0 0.0
  %1036 = vmatpush1.msra.mxu0 %v311
  %1037 = vmatprep.subr.mxu0 0.0
  %1038 = vmatpush1.msra.mxu0 %v312
  %1039 = vmatprep.subr.mxu0 0.0
  %1040 = vmatpush1.msra.mxu0 %v313
  %1041 = vmatprep.subr.mxu0 0.0
  %1042 = vmatpush1.msra.mxu0 %v314
  %1043 = vmatprep.subr.mxu0 0.0
  %1044 = vmatpush1.msra.mxu0 %v315
  %1045 = vmatprep.subr.mxu0 0.0
  %1046 = vmatpush1.msra.mxu0 %v316
  %1047 = vmatprep.subr.mxu0 0.0
  %1048 = vmatpush1.msra.mxu0 %v317
  %1049 = vmatprep.subr.mxu0 0.0
  %1050 = vmatpush1.msra.mxu0 %v318
  %1051 = vmatprep.subr.mxu0 0.0
  %1052 = vmatpush1.msra.mxu0 %v319
  %1053 = vmatprep.subr.mxu0 0.0
  %1054 = vmatpush1.msra.mxu0 %v320
  %1055 = vmatprep.subr.mxu0 0.0
  %1056 = vmatpush1.msra.mxu0 %v321
  %1057 = vmatprep.subr.mxu0 0.0
  %1058 = vmatpush1.msra.mxu0 %v322
  %1059 = vmatprep.subr.mxu0 0.0
  %1060 = vmatpush1.msra.mxu0 %v323
  %1061 = vmatprep.subr.mxu0 0.0
  %1062 = vmatpush1.msra.mxu0 %v324
  %1063 = vmatprep.subr.mxu0 0.0
  %1064 = vmatpush1.msra.mxu0 %v325
  %1065 = vmatprep.subr.mxu0 0.0
  %1066 = vmatpush1.msra.mxu0 %v326
  %1067 = vmatprep.subr.mxu0 0.0
  %1068 = vmatpush1.msra.mxu0 %v327
  %1069 = vmatprep.subr.mxu0 0.0
  %1070 = vmatpush1.msra.mxu0 %v328
  %1071 = vmatprep.subr.mxu0 0.0
  %1072 = vmatpush1.msra.mxu0 %v329
  %1073 = vmatprep.subr.mxu0 0.0
  %1074 = vmatpush1.msra.mxu0 %v330
  %1075 = vmatprep.subr.mxu0 0.0
  %1076 = vmatpush1.msra.mxu0 %v331
  %1077 = vmatprep.mubr.f32.mxu0 %v1006
  %1078 = vmatmul.mubr.f32.gmra.mrb[0].mxu0 %v1005
  %v1079 = vpop.f32.mrb[0].mxu0
  %v1080 = vadd.f32 0.0, %v1079
  %v1081 = vpop.f32.mrb[0].mxu0
  %1082 = vmatprep.mubr.f32.mxu0 %v1008
  %1083 = vmatmul.mubr.f32.gmra.mrb[0].mxu0 %v1007
  %v1084 = vpop.f32.mrb[0].mxu0
  %v1085 = vadd.f32 0.0, %v1084
  %v1086 = vpop.f32.mrb[0].mxu0
  %1087 = vdwg.mxu0
  %1088 = vset.pattern.permute.xlu0 15
  %1089 = vperm.xlu0 %1088, %v11
  %v1090 = vpop.permute.xlu0 %1089
  %1092 = vset.pattern.permute.xlu0 15
  %1093 = vperm.xlu0 %1092, %v12
  %v1094 = vpop.permute.xlu0 %1093
  %v1096 = vmul.f32 %v1080, %v1090
  %v1097 = vmul.f32 %v1085, %v1094
  %v1098 = vadd.f32 %v990, %v1096
  %v1099 = vadd.f32 %v991, %v1097
  %1100 = vrot.lane.b32.xlu0 %v332, 80
  %v1101 = vpop.permute.xlu0 %1100
  %1102 = vrot.lane.b32.xlu0 %v333, 80
  %v1103 = vpop.permute.xlu0 %1102
  %1104 = vrot.lane.b32.xlu0 %v334, 80
  %v1105 = vpop.permute.xlu0 %1104
  %1106 = vrot.lane.b32.xlu0 %v335, 80
  %v1107 = vpop.permute.xlu0 %1106
  %1108 = vrot.lane.b32.xlu0 %v336, 80
  %v1109 = vpop.permute.xlu0 %1108
  %1110 = vrot.lane.b32.xlu0 %v337, 80
  %v1111 = vpop.permute.xlu0 %1110
  %vm1112 = vcmask 654336
  %v1113 = vsel %vm1112, %v1101, %v1103
  %v1114 = vsel %vm1112, %v1103, %v1105
  %v1115 = vsel %vm1112, %v1107, %v1109
  %v1116 = vsel %vm1112, %v1109, %v1111
  %1121 = vmatprep.subr.mxu0 0.0
  %1122 = vmatpush1.msra.mxu0 %v267
  %1123 = vmatprep.subr.mxu0 0.0
  %1124 = vmatpush1.msra.mxu0 %v268
  %1125 = vmatprep.subr.mxu0 0.0
  %1126 = vmatpush1.msra.mxu0 %v269
  %1127 = vmatprep.subr.mxu0 0.0
  %1128 = vmatpush1.msra.mxu0 %v270
  %1129 = vmatprep.subr.mxu0 0.0
  %1130 = vmatpush1.msra.mxu0 %v271
  %1131 = vmatprep.subr.mxu0 0.0
  %1132 = vmatpush1.msra.mxu0 %v272
  %1133 = vmatprep.subr.mxu0 0.0
  %1134 = vmatpush1.msra.mxu0 %v273
  %1135 = vmatprep.subr.mxu0 0.0
  %1136 = vmatpush1.msra.mxu0 %v274
  %1137 = vmatprep.subr.mxu0 0.0
  %1138 = vmatpush1.msra.mxu0 %v275
  %1139 = vmatprep.subr.mxu0 0.0
  %1140 = vmatpush1.msra.mxu0 %v276
  %1141 = vmatprep.subr.mxu0 0.0
  %1142 = vmatpush1.msra.mxu0 %v277
  %1143 = vmatprep.subr.mxu0 0.0
  %1144 = vmatpush1.msra.mxu0 %v278
  %1145 = vmatprep.subr.mxu0 0.0
  %1146 = vmatpush1.msra.mxu0 %v279
  %1147 = vmatprep.subr.mxu0 0.0
  %1148 = vmatpush1.msra.mxu0 %v280
  %1149 = vmatprep.subr.mxu0 0.0
  %1150 = vmatpush1.msra.mxu0 %v281
  %1151 = vmatprep.subr.mxu0 0.0
  %1152 = vmatpush1.msra.mxu0 %v282
  %1153 = vmatprep.subr.mxu0 0.0
  %1154 = vmatpush1.msra.mxu0 %v283
  %1155 = vmatprep.subr.mxu0 0.0
  %1156 = vmatpush1.msra.mxu0 %v284
  %1157 = vmatprep.subr.mxu0 0.0
  %1158 = vmatpush1.msra.mxu0 %v285
  %1159 = vmatprep.subr.mxu0 0.0
  %1160 = vmatpush1.msra.mxu0 %v286
  %1161 = vmatprep.subr.mxu0 0.0
  %1162 = vmatpush1.msra.mxu0 %v287
  %1163 = vmatprep.subr.mxu0 0.0
  %1164 = vmatpush1.msra.mxu0 %v288
  %1165 = vmatprep.subr.mxu0 0.0
  %1166 = vmatpush1.msra.mxu0 %v289
  %1167 = vmatprep.subr.mxu0 0.0
  %1168 = vmatpush1.msra.mxu0 %v290
  %1169 = vmatprep.subr.mxu0 0.0
  %1170 = vmatpush1.msra.mxu0 %v291
  %1171 = vmatprep.subr.mxu0 0.0
  %1172 = vmatpush1.msra.mxu0 %v292
  %1173 = vmatprep.subr.mxu0 0.0
  %1174 = vmatpush1.msra.mxu0 %v293
  %1175 = vmatprep.subr.mxu0 0.0
  %1176 = vmatpush1.msra.mxu0 %v294
  %1177 = vmatprep.subr.mxu0 0.0
  %1178 = vmatpush1.msra.mxu0 %v295
  %1179 = vmatprep.subr.mxu0 0.0
  %1180 = vmatpush1.msra.mxu0 %v296
  %1181 = vmatprep.subr.mxu0 0.0
  %1182 = vmatpush1.msra.mxu0 %v297
  %1183 = vmatprep.subr.mxu0 0.0
  %1184 = vmatpush1.msra.mxu0 %v298
  %1185 = vmatprep.mubr.f32.mxu0 %v1114
  %1186 = vmatmul.mubr.f32.gmra.mrb[0].mxu0 %v1113
  %v1187 = vpop.f32.mrb[0].mxu0
  %v1188 = vadd.f32 0.0, %v1187
  %v1189 = vpop.f32.mrb[0].mxu0
  %1190 = vmatprep.mubr.f32.mxu0 %v1116
  %1191 = vmatmul.mubr.f32.gmra.mrb[0].mxu0 %v1115
  %v1192 = vpop.f32.mrb[0].mxu0
  %v1193 = vadd.f32 0.0, %v1192
  %v1194 = vpop.f32.mrb[0].mxu0
  %1195 = vdwg.mxu0
  %1196 = vset.pattern.permute.xlu0 16
  %1197 = vperm.xlu0 %1196, %v11
  %v1198 = vpop.permute.xlu0 %1197
  %1200 = vset.pattern.permute.xlu0 16
  %1201 = vperm.xlu0 %1200, %v12
  %v1202 = vpop.permute.xlu0 %1201
  %v1204 = vmul.f32 %v1188, %v1198
  %v1205 = vmul.f32 %v1193, %v1202
  %v1206 = vadd.f32 %v1098, %v1204
  %v1207 = vadd.f32 %v1099, %v1205
  %1208 = vrot.lane.b32.xlu0 %v332, 79
  %v1209 = vpop.permute.xlu0 %1208
  %1210 = vrot.lane.b32.xlu0 %v333, 79
  %v1211 = vpop.permute.xlu0 %1210
  %1212 = vrot.lane.b32.xlu0 %v334, 79
  %v1213 = vpop.permute.xlu0 %1212
  %1214 = vrot.lane.b32.xlu0 %v335, 79
  %v1215 = vpop.permute.xlu0 %1214
  %1216 = vrot.lane.b32.xlu0 %v336, 79
  %v1217 = vpop.permute.xlu0 %1216
  %1218 = vrot.lane.b32.xlu0 %v337, 79
  %v1219 = vpop.permute.xlu0 %1218
  %vm1220 = vcmask 646144
  %v1221 = vsel %vm1220, %v1209, %v1211
  %v1222 = vsel %vm1220, %v1211, %v1213
  %v1223 = vsel %vm1220, %v1215, %v1217
  %v1224 = vsel %vm1220, %v1217, %v1219
  %1229 = vmatprep.subr.mxu0 0.0
  %1230 = vmatpush1.msra.mxu0 %v267
  %1231 = vmatprep.subr.mxu0 0.0
  %1232 = vmatpush1.msra.mxu0 %v268
  %1233 = vmatprep.subr.mxu0 0.0
  %1234 = vmatpush1.msra.mxu0 %v269
  %1235 = vmatprep.subr.mxu0 0.0
  %1236 = vmatpush1.msra.mxu0 %v270
  %1237 = vmatprep.subr.mxu0 0.0
  %1238 = vmatpush1.msra.mxu0 %v271
  %1239 = vmatprep.subr.mxu0 0.0
  %1240 = vmatpush1.msra.mxu0 %v272
  %1241 = vmatprep.subr.mxu0 0.0
  %1242 = vmatpush1.msra.mxu0 %v273
  %1243 = vmatprep.subr.mxu0 0.0
  %1244 = vmatpush1.msra.mxu0 %v274
  %1245 = vmatprep.subr.mxu0 0.0
  %1246 = vmatpush1.msra.mxu0 %v275
  %1247 = vmatprep.subr.mxu0 0.0
  %1248 = vmatpush1.msra.mxu0 %v276
  %1249 = vmatprep.subr.mxu0 0.0
  %1250 = vmatpush1.msra.mxu0 %v277
  %1251 = vmatprep.subr.mxu0 0.0
  %1252 = vmatpush1.msra.mxu0 %v278
  %1253 = vmatprep.subr.mxu0 0.0
  %1254 = vmatpush1.msra.mxu0 %v279
  %1255 = vmatprep.subr.mxu0 0.0
  %1256 = vmatpush1.msra.mxu0 %v280
  %1257 = vmatprep.subr.mxu0 0.0
  %1258 = vmatpush1.msra.mxu0 %v281
  %1259 = vmatprep.subr.mxu0 0.0
  %1260 = vmatpush1.msra.mxu0 %v282
  %1261 = vmatprep.subr.mxu0 0.0
  %1262 = vmatpush1.msra.mxu0 %v283
  %1263 = vmatprep.subr.mxu0 0.0
  %1264 = vmatpush1.msra.mxu0 %v284
  %1265 = vmatprep.subr.mxu0 0.0
  %1266 = vmatpush1.msra.mxu0 %v285
  %1267 = vmatprep.subr.mxu0 0.0
  %1268 = vmatpush1.msra.mxu0 %v286
  %1269 = vmatprep.subr.mxu0 0.0
  %1270 = vmatpush1.msra.mxu0 %v287
  %1271 = vmatprep.subr.mxu0 0.0
  %1272 = vmatpush1.msra.mxu0 %v288
  %1273 = vmatprep.subr.mxu0 0.0
  %1274 = vmatpush1.msra.mxu0 %v289
  %1275 = vmatprep.subr.mxu0 0.0
  %1276 = vmatpush1.msra.mxu0 %v290
  %1277 = vmatprep.subr.mxu0 0.0
  %1278 = vmatpush1.msra.mxu0 %v291
  %1279 = vmatprep.subr.mxu0 0.0
  %1280 = vmatpush1.msra.mxu0 %v292
  %1281 = vmatprep.subr.mxu0 0.0
  %1282 = vmatpush1.msra.mxu0 %v293
  %1283 = vmatprep.subr.mxu0 0.0
  %1284 = vmatpush1.msra.mxu0 %v294
  %1285 = vmatprep.subr.mxu0 0.0
  %1286 = vmatpush1.msra.mxu0 %v295
  %1287 = vmatprep.subr.mxu0 0.0
  %1288 = vmatpush1.msra.mxu0 %v296
  %1289 = vmatprep.subr.mxu0 0.0
  %1290 = vmatpush1.msra.mxu0 %v297
  %1291 = vmatprep.subr.mxu0 0.0
  %1292 = vmatpush1.msra.mxu0 %v298
  %1293 = vmatprep.mubr.f32.mxu0 %v1222
  %1294 = vmatmul.mubr.f32.gmra.mrb[0].mxu0 %v1221
  %v1295 = vpop.f32.mrb[0].mxu0
  %v1296 = vadd.f32 0.0, %v1295
  %v1297 = vpop.f32.mrb[0].mxu0
  %1298 = vmatprep.mubr.f32.mxu0 %v1224
  %1299 = vmatmul.mubr.f32.gmra.mrb[0].mxu0 %v1223
  %v1300 = vpop.f32.mrb[0].mxu0
  %v1301 = vadd.f32 0.0, %v1300
  %v1302 = vpop.f32.mrb[0].mxu0
  %1303 = vdwg.mxu0
  %1304 = vset.pattern.permute.xlu0 17
  %1305 = vperm.xlu0 %1304, %v11
  %v1306 = vpop.permute.xlu0 %1305
  %1308 = vset.pattern.permute.xlu0 17
  %1309 = vperm.xlu0 %1308, %v12
  %v1310 = vpop.permute.xlu0 %1309
  %v1312 = vmul.f32 %v1296, %v1306
  %v1313 = vmul.f32 %v1301, %v1310
  %v1314 = vadd.f32 %v1206, %v1312
  %v1315 = vadd.f32 %v1207, %v1313
  %1316 = vset.pattern.permute.xlu0 18
  %1317 = vperm.xlu0 %1316, %v11
  %v1318 = vpop.permute.xlu0 %1317
  %1320 = vset.pattern.permute.xlu0 18
  %1321 = vperm.xlu0 %1320, %v12
  %v1322 = vpop.permute.xlu0 %1321
  %v1324 = vadd.f32 %v1314, %v1318
  %v1325 = vadd.f32 %v1315, %v1322
  %vm1326 = vcmp.gt.f32.partialorder %v1324, 0.0
  %vm1327 = vcmp.gt.f32.partialorder %v1325, 0.0
  %1328 = vset.pattern.permute.xlu0 20
  %1329 = vperm.xlu0 %1328, %v11
  %v1330 = vpop.permute.xlu0 %1329
  %1332 = vset.pattern.permute.xlu0 20
  %1333 = vperm.xlu0 %1332, %v12
  %v1334 = vpop.permute.xlu0 %1333
  %v1336 = vmul.f32 %v1330, %v1324
  %v1337 = vmul.f32 %v1334, %v1325
  %v1338 = vsel %vm1326, %v1324, %v1336
  %v1339 = vsel %vm1327, %v1325, %v1337
  %1340 = vset.pattern.permute.xlu0 29
  %1341 = vperm.xlu0 %1340, %v11
  %v1342 = vpop.permute.xlu0 %1341
  %1344 = vrot.lane.b32.xlu0 %v11, 107
  %v1345 = vpop.permute.xlu0 %1344
  %vm1346 = vcmask 64512
  %v1347 = vsel %vm1346, %v1345, 0
  %1349 = vmatprep.subr.mxu0 0.0
  %1350 = vmatpush1.msra.mxu0 %v1338
  %1351 = vmatprep.subr.mxu0 0.0
  %1352 = vmatpush1.msra.mxu0 0.0
  %1353 = vmatprep.subr.mxu0 0.0
  %1354 = vmatpush1.msra.mxu0 0.0
  %1355 = vmatprep.subr.mxu0 0.0
  %1356 = vmatpush1.msra.mxu0 0.0
  %1357 = vmatprep.subr.mxu0 0.0
  %1358 = vmatpush1.msra.mxu0 0.0
  %1359 = vmatprep.subr.mxu0 0.0
  %1360 = vmatpush1.msra.mxu0 0.0
  %1361 = vmatprep.subr.mxu0 0.0
  %1362 = vmatpush1.msra.mxu0 0.0
  %1363 = vmatprep.subr.mxu0 0.0
  %1364 = vmatpush1.msra.mxu0 0.0
  %1365 = vmatprep.subr.mxu0 0.0
  %1366 = vmatpush1.msra.mxu0 0.0
  %1367 = vmatprep.subr.mxu0 0.0
  %1368 = vmatpush1.msra.mxu0 0.0
  %1369 = vmatprep.subr.mxu0 0.0
  %1370 = vmatpush1.msra.mxu0 0.0
  %1371 = vmatprep.subr.mxu0 0.0
  %1372 = vmatpush1.msra.mxu0 0.0
  %1373 = vmatprep.subr.mxu0 0.0
  %1374 = vmatpush1.msra.mxu0 0.0
  %1375 = vmatprep.subr.mxu0 0.0
  %1376 = vmatpush1.msra.mxu0 0.0
  %1377 = vmatprep.subr.mxu0 0.0
  %1378 = vmatpush1.msra.mxu0 0.0
  %1379 = vmatprep.subr.mxu0 0.0
  %1380 = vmatpush1.msra.mxu0 0.0
  %1381 = vmatprep.subr.mxu0 0.0
  %1382 = vmatpush1.msra.mxu0 0.0
  %1383 = vmatprep.subr.mxu0 0.0
  %1384 = vmatpush1.msra.mxu0 0.0
  %1385 = vmatprep.subr.mxu0 0.0
  %1386 = vmatpush1.msra.mxu0 0.0
  %1387 = vmatprep.subr.mxu0 0.0
  %1388 = vmatpush1.msra.mxu0 0.0
  %1389 = vmatprep.subr.mxu0 0.0
  %1390 = vmatpush1.msra.mxu0 0.0
  %1391 = vmatprep.subr.mxu0 0.0
  %1392 = vmatpush1.msra.mxu0 0.0
  %1393 = vmatprep.subr.mxu0 0.0
  %1394 = vmatpush1.msra.mxu0 0.0
  %1395 = vmatprep.subr.mxu0 0.0
  %1396 = vmatpush1.msra.mxu0 0.0
  %1397 = vmatprep.subr.mxu0 0.0
  %1398 = vmatpush1.msra.mxu0 0.0
  %1399 = vmatprep.subr.mxu0 0.0
  %1400 = vmatpush1.msra.mxu0 0.0
  %1401 = vmatprep.subr.mxu0 0.0
  %1402 = vmatpush1.msra.mxu0 0.0
  %1403 = vmatprep.subr.mxu0 0.0
  %1404 = vmatpush1.msra.mxu0 0.0
  %1405 = vmatprep.subr.mxu0 0.0
  %1406 = vmatpush1.msra.mxu0 0.0
  %1407 = vmatprep.subr.mxu0 0.0
  %1408 = vmatpush1.msra.mxu0 0.0
  %1409 = vmatprep.subr.mxu0 0.0
  %1410 = vmatpush1.msra.mxu0 0.0
  %1411 = vmatprep.subr.mxu0 0.0
  %1412 = vmatpush1.msra.mxu0 0.0
  %1413 = vmatprep.mubr.f32.mxu0 0.0
  %1414 = vmatmul.mubr.f32.gmra.mrb[0].mxu0 %v1347
  %v1415 = vpop.f32.mrb[0].mxu0
  %v1416 = vadd.f32 %v1342, %v1415
  %v1417 = vpop.f32.mrb[0].mxu0
  %1418 = vdwg.mxu0
  %1419 = vmatprep.subr.mxu0 0.0
  %1420 = vmatpush1.msra.mxu0 %v1339
  %1421 = vmatprep.subr.mxu0 0.0
  %1422 = vmatpush1.msra.mxu0 0.0
  %1423 = vmatprep.subr.mxu0 0.0
  %1424 = vmatpush1.msra.mxu0 0.0
  %1425 = vmatprep.subr.mxu0 0.0
  %1426 = vmatpush1.msra.mxu0 0.0
  %1427 = vmatprep.subr.mxu0 0.0
  %1428 = vmatpush1.msra.mxu0 0.0
  %1429 = vmatprep.subr.mxu0 0.0
  %1430 = vmatpush1.msra.mxu0 0.0
  %1431 = vmatprep.subr.mxu0 0.0
  %1432 = vmatpush1.msra.mxu0 0.0
  %1433 = vmatprep.subr.mxu0 0.0
  %1434 = vmatpush1.msra.mxu0 0.0
  %1435 = vmatprep.subr.mxu0 0.0
  %1436 = vmatpush1.msra.mxu0 0.0
  %1437 = vmatprep.subr.mxu0 0.0
  %1438 = vmatpush1.msra.mxu0 0.0
  %1439 = vmatprep.subr.mxu0 0.0
  %1440 = vmatpush1.msra.mxu0 0.0
  %1441 = vmatprep.subr.mxu0 0.0
  %1442 = vmatpush1.msra.mxu0 0.0
  %1443 = vmatprep.subr.mxu0 0.0
  %1444 = vmatpush1.msra.mxu0 0.0
  %1445 = vmatprep.subr.mxu0 0.0
  %1446 = vmatpush1.msra.mxu0 0.0
  %1447 = vmatprep.subr.mxu0 0.0
  %1448 = vmatpush1.msra.mxu0 0.0
  %1449 = vmatprep.subr.mxu0 0.0
  %1450 = vmatpush1.msra.mxu0 0.0
  %1451 = vmatprep.subr.mxu0 0.0
  %1452 = vmatpush1.msra.mxu0 0.0
  %1453 = vmatprep.subr.mxu0 0.0
  %1454 = vmatpush1.msra.mxu0 0.0
  %1455 = vmatprep.subr.mxu0 0.0
  %1456 = vmatpush1.msra.mxu0 0.0
  %1457 = vmatprep.subr.mxu0 0.0
  %1458 = vmatpush1.msra.mxu0 0.0
  %1459 = vmatprep.subr.mxu0 0.0
  %1460 = vmatpush1.msra.mxu0 0.0
  %1461 = vmatprep.subr.mxu0 0.0
  %1462 = vmatpush1.msra.mxu0 0.0
  %1463 = vmatprep.subr.mxu0 0.0
  %1464 = vmatpush1.msra.mxu0 0.0
  %1465 = vmatprep.subr.mxu0 0.0
  %1466 = vmatpush1.msra.mxu0 0.0
  %1467 = vmatprep.subr.mxu0 0.0
  %1468 = vmatpush1.msra.mxu0 0.0
  %1469 = vmatprep.subr.mxu0 0.0
  %1470 = vmatpush1.msra.mxu0 0.0
  %1471 = vmatprep.subr.mxu0 0.0
  %1472 = vmatpush1.msra.mxu0 0.0
  %1473 = vmatprep.subr.mxu0 0.0
  %1474 = vmatpush1.msra.mxu0 0.0
  %1475 = vmatprep.subr.mxu0 0.0
  %1476 = vmatpush1.msra.mxu0 0.0
  %1477 = vmatprep.subr.mxu0 0.0
  %1478 = vmatpush1.msra.mxu0 0.0
  %1479 = vmatprep.subr.mxu0 0.0
  %1480 = vmatpush1.msra.mxu0 0.0
  %1481 = vmatprep.subr.mxu0 0.0
  %1482 = vmatpush1.msra.mxu0 0.0
  %1483 = vmatprep.mubr.f32.mxu0 0.0
  %1484 = vmatmul.mubr.f32.gmra.mrb[0].mxu0 %v1347
  %v1485 = vpop.f32.mrb[0].mxu0
  %v1486 = vadd.f32 %v1342, %v1485
  %v1487 = vpop.f32.mrb[0].mxu0
  %1488 = vdwg.mxu0
  %1490 = vrot.lane.b32.xlu0 %v1486, 64
  %v1491 = vpop.permute.xlu0 %1490
  %v1493 = vsel %vm130, %v1416, %v1491
  %1494 = vst [vmem:[%s2] sm:$0xff] %v1493
  // Predicated region
  $region10: #{depthwise_forward.1} parent=0 // pred_check
    _
  $region11: #{depthwise_forward.1} parent=0 // pred_check_branch
    %1496 = sbr.rel (0) target = $region13
  $region12: #{depthwise_forward.1} parent=0 // pred_region
    _
  $region13: #{depthwise_forward.1} parent=0 // pred_fallthru
    _
  // Predicated region
  $region14: #{depthwise_forward.1} parent=0 // pred_check
    _
  $region15: #{depthwise_forward.1} parent=0 // pred_check_branch
    %1498 = sbr.rel (0) target = $region17
  $region16: #{depthwise_forward.1} parent=0 // pred_region
    _
  $region17: #{depthwise_forward.1} parent=0 // pred_fallthru
    _

</llo_original>
